<compile_context>
chip_gen: v7x
topology: tpu7x:2x2x1
jax: 0.10.0
libtpu: 0.0.40
codegen_flags: <defaults>
</compile_context>

<pallas_src>
import jax
import jax.numpy as jnp
from jax.experimental import pallas as pl
from jax.experimental.pallas import tpu as pltpu

_LANE = 128
_TARGET_BLOCK_BYTES = 4 << 20   # ~4 MiB per block buffer: bandwidth sweet spot on v5e/v6e/v7x
_SMALL_BYTES = 1 << 20          # inputs below this -> plain fused XLA (skip pallas_call)
_PALLAS_DTYPES = (jnp.float32, jnp.bfloat16, jnp.float16)


def _avg_kernel(y1_ref, y2_ref, o_ref):
    # Pure VPU elementwise; y1*0.5 + y2*0.5 avoids fp16/bf16 overflow in the add.
    o_ref[...] = y1_ref[...] * 0.5 + y2_ref[...] * 0.5


def _dimension_semantics():
    # Only CORE_PARALLEL / SUBCORE_PARALLEL change codegen; use CORE_PARALLEL on
    # v7x so the row-tile grid is split across both TensorCores. Single-TC
    # v5e/v6e keep the already-validated "parallel".
    try:
        kind = jax.devices()[0].device_kind.lower()
    except Exception:
        kind = ""
    if ("v7" in kind or "tpu7" in kind) and hasattr(pltpu, "CORE_PARALLEL"):
        return (pltpu.CORE_PARALLEL,)
    return ("parallel",)


def _pallas_avg_2d(y1_2d, y2_2d, tile_r):
    rows, C = y1_2d.shape
    dtype = y1_2d.dtype
    itemsize = jnp.dtype(dtype).itemsize
    n = rows * C

    grid = (pl.cdiv(rows, tile_r),)          # no row padding; last block masked by Pallas
    spec = pl.BlockSpec((tile_r, C), lambda i: (i, 0))

    block_bytes = tile_r * C * itemsize
    # 3 arrays x 2 pipeline buffers + headroom. Explicit so v5e's 16 MiB default
    # scoped VMEM doesn't silently shrink buffers; bounded <= ~28 MiB, well under
    # v7x's 64 MiB physical VMEM per TC.
    vmem_limit = int(6 * block_bytes + (4 << 20))

    cost = pl.CostEstimate(
        flops=3 * n,                          # two muls + one add per element
        transcendentals=0,
        bytes_accessed=3 * n * itemsize,      # memory-dominated op
    )

    return pl.pallas_call(
        _avg_kernel,
        out_shape=jax.ShapeDtypeStruct((rows, C), dtype),
        grid=grid,
        in_specs=[spec, spec],
        out_specs=spec,
        compiler_params=pltpu.CompilerParams(
            dimension_semantics=_dimension_semantics(),
            vmem_limit_bytes=vmem_limit,
        ),
        cost_estimate=cost,
    )(y1_2d, y2_2d)


def strategy_forward(y1, y2):
    """(y1 + y2) / 2 — Pallas TPU kernel for large float tensors, fused XLA otherwise."""
    n = int(y1.size)
    itemsize = jnp.dtype(y1.dtype).itemsize

    # Fallback paths: empty / tiny tensors (launch overhead + fusion barrier lose
    # to fused XLA), broadcasting / mismatched shapes, non-128-divisible sizes
    # (avoids pad/slice HBM round trips), and integer dtypes (true division
    # promotes to float, matching torch).
    use_pallas = (
        y1.shape == y2.shape
        and y1.dtype == y2.dtype
        and y1.dtype in _PALLAS_DTYPES
        and n % _LANE == 0
        and n * itemsize >= _SMALL_BYTES
    )
    if not use_pallas:
        return (y1 + y2) / 2

    # ---- lane-dense 2D slab: C = largest multiple of 128 (<=1024) dividing n ----
    C = _LANE
    for c in range(1024, _LANE - 1, -_LANE):
        if n % c == 0:
            C = c
            break
    rows = n // C

    # Dtype-aware tile: ~4 MiB per block buffer, second-to-last block dim a
    # multiple of the sublane packing (8 for f32, 16 for bf16/fp16) unless it is
    # the full array dim.
    sublane = 8 if itemsize == 4 else 16
    tile_r_max = max(sublane, (_TARGET_BLOCK_BYTES // (C * itemsize)) // sublane * sublane)
    tile_r = rows if rows <= tile_r_max else tile_r_max

    y1_2d = y1.reshape(rows, C)              # free: contiguous reshape, no copy
    y2_2d = y2.reshape(rows, C)
    out_2d = _pallas_avg_2d(y1_2d, y2_2d, tile_r)
    return out_2d.reshape(y1.shape)


if __name__ == "__main__":
    key = jax.random.PRNGKey(0)

    def _check(shape, dtype, k):
        k1, k2 = jax.random.split(k)
        y1 = jax.random.normal(k1, shape, dtype=dtype)
        y2 = jax.random.normal(k2, shape, dtype=dtype)
        out = jax.block_until_ready(strategy_forward(y1, y2))
        ref = (y1.astype(jnp.float32) + y2.astype(jnp.float32)) * 0.5
        assert out.shape == y1.shape and out.dtype == dtype, "shape/dtype mismatch"
        tol = 1e-6 if dtype == jnp.float32 else 5e-2
        assert jnp.allclose(out.astype(jnp.float32), ref, atol=tol, rtol=tol), "value mismatch"

    keys = jax.random.split(key, 3)
    # Module-scale small shape (batch=2, channels=4, 16x16): fused-XLA fallback path.
    _check((2, 4, 16, 16), jnp.float32, keys[0])
    # bf16 tensor large enough for the Pallas path (single row-tile, full-dim block).
    _check((512, 1024), jnp.bfloat16, keys[1])
    # f32 tensor with rows > tile_r: multi-step grid with a partial (masked) last block.
    _check((1500, 1024), jnp.float32, keys[2])

    print("KERNEL_OK")
</pallas_src>

<mosaic_0001>
module attributes {stable_mosaic.version = 11 : i64} {
  func.func @_avg_kernel(%arg0: i32, %arg1: memref<512x1024xbf16, #tpu.memory_space<vmem>>, %arg2: memref<512x1024xbf16, #tpu.memory_space<vmem>>, %arg3: memref<512x1024xbf16, #tpu.memory_space<vmem>>) attributes {dimension_semantics = [#tpu.dimension_semantics<parallel>], iteration_bounds = array<i64: 1>, scalar_prefetch = 0 : i64, scratch_operands = 0 : i64, tpu.core_type = #tpu.core_type<tc>, window_params = [{transform_indices = @transform_0, window_bounds = array<i64: 512, 1024>}, {transform_indices = @transform_1, window_bounds = array<i64: 512, 1024>}, {transform_indices = @transform_2, window_bounds = array<i64: 512, 1024>}]} {
    %c0 = arith.constant 0 : index
    %c0_0 = arith.constant 0 : index
    %0 = vector.load %arg1[%c0, %c0_0] : memref<512x1024xbf16, #tpu.memory_space<vmem>>, vector<512x1024xbf16>
    %cst = arith.constant 5.000000e-01 : bf16
    %1 = vector.broadcast %cst : bf16 to vector<512x1024xbf16>
    %2 = arith.mulf %0, %1 : vector<512x1024xbf16>
    %c0_1 = arith.constant 0 : index
    %c0_2 = arith.constant 0 : index
    %3 = vector.load %arg2[%c0_1, %c0_2] : memref<512x1024xbf16, #tpu.memory_space<vmem>>, vector<512x1024xbf16>
    %cst_3 = arith.constant 5.000000e-01 : bf16
    %4 = vector.broadcast %cst_3 : bf16 to vector<512x1024xbf16>
    %5 = arith.mulf %3, %4 : vector<512x1024xbf16>
    %6 = arith.addf %2, %5 : vector<512x1024xbf16>
    %c0_4 = arith.constant 0 : index
    %c0_5 = arith.constant 0 : index
    %7 = vector.load %arg3[%c0_4, %c0_5] : memref<512x1024xbf16, #tpu.memory_space<vmem>>, vector<512x1024xbf16>
    tpu.vector_store %arg3[%c0_4, %c0_5], %6 {strides = array<i32>} : memref<512x1024xbf16, #tpu.memory_space<vmem>>, vector<512x1024xbf16>,
    return
  }
  func.func @transform_0(%arg0: i32) -> (i32, i32) {
    %c0_i32 = arith.constant 0 : i32
    %c0_i32_0 = arith.constant 0 : i32
    return %arg0, %c0_i32 : i32, i32
  }
  func.func @transform_1(%arg0: i32) -> (i32, i32) {
    %c0_i32 = arith.constant 0 : i32
    %c0_i32_0 = arith.constant 0 : i32
    return %arg0, %c0_i32 : i32, i32
  }
  func.func @transform_2(%arg0: i32) -> (i32, i32) {
    %c0_i32 = arith.constant 0 : i32
    %c0_i32_0 = arith.constant 0 : i32
    return %arg0, %c0_i32 : i32, i32
  }
}

</mosaic_0001>

<llo_original>
// kernel: tpu_custom_call.1
$region0: #{tpu_custom_call.1}
  #allocation0 [shape = 'u32[]', space=smem, size = 0x4, offset = 0x4, fixed_abs, tag = 'smem constant byte address 0x4 - core index']
  #allocation1 [shape = 'u32[144,128]{1,0:T(1,128)}', space=vmem, size = 0x12000, scoped, tag = 'internal scratch']
  %s0 = inlined_call_operand.hbm [shape: bf16[512,1024], index: 0, kind: input, shape index: {}]
  %s1 = inlined_call_operand.hbm [shape: bf16[512,1024], index: 1, kind: input, shape index: {}]
  %s2 = inlined_call_operand.hbm [shape: bf16[512,1024], index: 2, kind: output, shape index: {}]
  %s3 = sld [smem:[#allocation0]]
  $region26: #{tpu_custom_call.1} parent=0
    _
  %s5 = ssub.s32 1, %s3
  %s6 = scalar_select 0, %s5, %s3
  $region1: #{tpu_custom_call.1} parent=0
    #allocation2 [shape = 'u8[1048576]{0}', space=vmem, size = 0x100000, scoped, tag = 'input window, operand 0, single buffered']
    #allocation3 [shape = 's32[1]{0}', space=sflag, size = 0x4, scoped, tag = 'scoped memory for tpu_custom_call.1']
    #allocation4 [shape = 's32[1]{0}', space=sflag, size = 0x4, scoped, tag = 'scoped memory for tpu_custom_call.1']
    #allocation5 [shape = 'u8[1048576]{0}', space=vmem, size = 0x100000, scoped, tag = 'input window, operand 1, single buffered']
    #allocation6 [shape = 's32[1]{0}', space=sflag, size = 0x4, scoped, tag = 'scoped memory for tpu_custom_call.1']
    #allocation7 [shape = 'u8[1048576]{0}', space=vmem, size = 0x100000, scoped, tag = 'output window, operand 0, single buffered']
    %7 = vsyncpa [#allocation3], 0
    %8 = vsyncpa [#allocation6], 0
    %9 = vsyncpa [#allocation4], 0
    // Predicated region
    $region2: #{tpu_custom_call.1} parent=1 // pred_check
      _
    $region3: #{tpu_custom_call.1} parent=1 // pred_check_branch
      %11 = sbr.rel (0) target = $region5
    $region4: #{tpu_custom_call.1} parent=1 // pred_region
      %s13 = ssub.s32 32768, 32768
      %14 = vsyncadd [#allocation3], %s13
      %s15 = sshll.u32 [#allocation2], 4
      %s16 = int_to_ptr.vmem [resolvable:$true] %s15
      %21 = dma.hbm_to_vmem [thread:$0]  %s0, 32768, %s16, [#allocation3], 512, 512, 32
    $region5: #{tpu_custom_call.1} parent=1 // pred_fallthru
      _
    // Predicated region
    $region6: #{tpu_custom_call.1} parent=1 // pred_check
      _
    $region7: #{tpu_custom_call.1} parent=1 // pred_check_branch
      %23 = sbr.rel (0) target = $region9
    $region8: #{tpu_custom_call.1} parent=1 // pred_region
      %s25 = ssub.s32 32768, 32768
      %26 = vsyncadd [#allocation6], %s25
      %s27 = sshll.u32 [#allocation5], 4
      %s28 = int_to_ptr.vmem [resolvable:$true] %s27
      %33 = dma.hbm_to_vmem [thread:$0]  %s1, 32768, %s28, [#allocation6], 512, 512, 32
    $region9: #{tpu_custom_call.1} parent=1 // pred_fallthru
      _
    // Predicated region
    $region10: #{tpu_custom_call.1} parent=1 // pred_check
      _
    $region11: #{tpu_custom_call.1} parent=1 // pred_check_branch
      %35 = sbr.rel (0) target = $region13
    $region12: #{tpu_custom_call.1} parent=1 // pred_region
      %36 = dma.done [#allocation3], 32768
    $region13: #{tpu_custom_call.1} parent=1 // pred_fallthru
      _
    // Predicated region
    $region14: #{tpu_custom_call.1} parent=1 // pred_check
      _
    $region15: #{tpu_custom_call.1} parent=1 // pred_check_branch
      %38 = sbr.rel (0) target = $region17
    $region16: #{tpu_custom_call.1} parent=1 // pred_region
      %39 = dma.done [#allocation6], 32768
    $region17: #{tpu_custom_call.1} parent=1 // pred_fallthru
      _
    %v41 = vld [vmem:[#allocation2] sm:$0xff]
    %v42 = vld [vmem:[#allocation2 + $0x8] sm:$0xff]
    %v43 = vld [vmem:[#allocation2 + $0x10] sm:$0xff]
    %v44 = vld [vmem:[#allocation2 + $0x18] sm:$0xff]
    %v45 = vld [vmem:[#allocation2 + $0x20] sm:$0xff]
    %v46 = vld [vmem:[#allocation2 + $0x28] sm:$0xff]
    %v47 = vld [vmem:[#allocation2 + $0x30] sm:$0xff]
    %v48 = vld [vmem:[#allocation2 + $0x38] sm:$0xff]
    %v49 = vld [vmem:[#allocation2 + $0x40] sm:$0xff]
    %v50 = vld [vmem:[#allocation2 + $0x48] sm:$0xff]
    %v51 = vld [vmem:[#allocation2 + $0x50] sm:$0xff]
    %v52 = vld [vmem:[#allocation2 + $0x58] sm:$0xff]
    %v53 = vld [vmem:[#allocation2 + $0x60] sm:$0xff]
    %v54 = vld [vmem:[#allocation2 + $0x68] sm:$0xff]
    %v55 = vld [vmem:[#allocation2 + $0x70] sm:$0xff]
    %v56 = vld [vmem:[#allocation2 + $0x78] sm:$0xff]
    %v57 = vld [vmem:[#allocation2 + $0x80] sm:$0xff]
    %v58 = vld [vmem:[#allocation2 + $0x88] sm:$0xff]
    %v59 = vld [vmem:[#allocation2 + $0x90] sm:$0xff]
    %v60 = vld [vmem:[#allocation2 + $0x98] sm:$0xff]
    %v61 = vld [vmem:[#allocation2 + $0xa0] sm:$0xff]
    %v62 = vld [vmem:[#allocation2 + $0xa8] sm:$0xff]
    %v63 = vld [vmem:[#allocation2 + $0xb0] sm:$0xff]
    %v64 = vld [vmem:[#allocation2 + $0xb8] sm:$0xff]
    %v65 = vld [vmem:[#allocation2 + $0xc0] sm:$0xff]
    %v66 = vld [vmem:[#allocation2 + $0xc8] sm:$0xff]
    %v67 = vld [vmem:[#allocation2 + $0xd0] sm:$0xff]
    %v68 = vld [vmem:[#allocation2 + $0xd8] sm:$0xff]
    %v69 = vld [vmem:[#allocation2 + $0xe0] sm:$0xff]
    %v70 = vld [vmem:[#allocation2 + $0xe8] sm:$0xff]
    %v71 = vld [vmem:[#allocation2 + $0xf0] sm:$0xff]
    %v72 = vld [vmem:[#allocation2 + $0xf8] sm:$0xff]
    %v73 = vld [vmem:[#allocation2 + $0x100] sm:$0xff]
    %v74 = vld [vmem:[#allocation2 + $0x108] sm:$0xff]
    %v75 = vld [vmem:[#allocation2 + $0x110] sm:$0xff]
    %v76 = vld [vmem:[#allocation2 + $0x118] sm:$0xff]
    %v77 = vld [vmem:[#allocation2 + $0x120] sm:$0xff]
    %v78 = vld [vmem:[#allocation2 + $0x128] sm:$0xff]
    %v79 = vld [vmem:[#allocation2 + $0x130] sm:$0xff]
    %v80 = vld [vmem:[#allocation2 + $0x138] sm:$0xff]
    %v81 = vld [vmem:[#allocation2 + $0x140] sm:$0xff]
    %v82 = vld [vmem:[#allocation2 + $0x148] sm:$0xff]
    %v83 = vld [vmem:[#allocation2 + $0x150] sm:$0xff]
    %v84 = vld [vmem:[#allocation2 + $0x158] sm:$0xff]
    %v85 = vld [vmem:[#allocation2 + $0x160] sm:$0xff]
    %v86 = vld [vmem:[#allocation2 + $0x168] sm:$0xff]
    %v87 = vld [vmem:[#allocation2 + $0x170] sm:$0xff]
    %v88 = vld [vmem:[#allocation2 + $0x178] sm:$0xff]
    %v89 = vld [vmem:[#allocation2 + $0x180] sm:$0xff]
    %v90 = vld [vmem:[#allocation2 + $0x188] sm:$0xff]
    %v91 = vld [vmem:[#allocation2 + $0x190] sm:$0xff]
    %v92 = vld [vmem:[#allocation2 + $0x198] sm:$0xff]
    %v93 = vld [vmem:[#allocation2 + $0x1a0] sm:$0xff]
    %v94 = vld [vmem:[#allocation2 + $0x1a8] sm:$0xff]
    %v95 = vld [vmem:[#allocation2 + $0x1b0] sm:$0xff]
    %v96 = vld [vmem:[#allocation2 + $0x1b8] sm:$0xff]
    %v97 = vld [vmem:[#allocation2 + $0x1c0] sm:$0xff]
    %v98 = vld [vmem:[#allocation2 + $0x1c8] sm:$0xff]
    %v99 = vld [vmem:[#allocation2 + $0x1d0] sm:$0xff]
    %v100 = vld [vmem:[#allocation2 + $0x1d8] sm:$0xff]
    %v101 = vld [vmem:[#allocation2 + $0x1e0] sm:$0xff]
    %v102 = vld [vmem:[#allocation2 + $0x1e8] sm:$0xff]
    %v103 = vld [vmem:[#allocation2 + $0x1f0] sm:$0xff]
    %v104 = vld [vmem:[#allocation2 + $0x1f8] sm:$0xff]
    %v105 = vld [vmem:[#allocation2 + $0x200] sm:$0xff]
    %v106 = vld [vmem:[#allocation2 + $0x208] sm:$0xff]
    %v107 = vld [vmem:[#allocation2 + $0x210] sm:$0xff]
    %v108 = vld [vmem:[#allocation2 + $0x218] sm:$0xff]
    %v109 = vld [vmem:[#allocation2 + $0x220] sm:$0xff]
    %v110 = vld [vmem:[#allocation2 + $0x228] sm:$0xff]
    %v111 = vld [vmem:[#allocation2 + $0x230] sm:$0xff]
    %v112 = vld [vmem:[#allocation2 + $0x238] sm:$0xff]
    %v113 = vld [vmem:[#allocation2 + $0x240] sm:$0xff]
    %v114 = vld [vmem:[#allocation2 + $0x248] sm:$0xff]
    %v115 = vld [vmem:[#allocation2 + $0x250] sm:$0xff]
    %v116 = vld [vmem:[#allocation2 + $0x258] sm:$0xff]
    %v117 = vld [vmem:[#allocation2 + $0x260] sm:$0xff]
    %v118 = vld [vmem:[#allocation2 + $0x268] sm:$0xff]
    %v119 = vld [vmem:[#allocation2 + $0x270] sm:$0xff]
    %v120 = vld [vmem:[#allocation2 + $0x278] sm:$0xff]
    %v121 = vld [vmem:[#allocation2 + $0x280] sm:$0xff]
    %v122 = vld [vmem:[#allocation2 + $0x288] sm:$0xff]
    %v123 = vld [vmem:[#allocation2 + $0x290] sm:$0xff]
    %v124 = vld [vmem:[#allocation2 + $0x298] sm:$0xff]
    %v125 = vld [vmem:[#allocation2 + $0x2a0] sm:$0xff]
    %v126 = vld [vmem:[#allocation2 + $0x2a8] sm:$0xff]
    %v127 = vld [vmem:[#allocation2 + $0x2b0] sm:$0xff]
    %v128 = vld [vmem:[#allocation2 + $0x2b8] sm:$0xff]
    %v129 = vld [vmem:[#allocation2 + $0x2c0] sm:$0xff]
    %v130 = vld [vmem:[#allocation2 + $0x2c8] sm:$0xff]
    %v131 = vld [vmem:[#allocation2 + $0x2d0] sm:$0xff]
    %v132 = vld [vmem:[#allocation2 + $0x2d8] sm:$0xff]
    %v133 = vld [vmem:[#allocation2 + $0x2e0] sm:$0xff]
    %v134 = vld [vmem:[#allocation2 + $0x2e8] sm:$0xff]
    %v135 = vld [vmem:[#allocation2 + $0x2f0] sm:$0xff]
    %v136 = vld [vmem:[#allocation2 + $0x2f8] sm:$0xff]
    %v137 = vld [vmem:[#allocation2 + $0x300] sm:$0xff]
    %v138 = vld [vmem:[#allocation2 + $0x308] sm:$0xff]
    %v139 = vld [vmem:[#allocation2 + $0x310] sm:$0xff]
    %v140 = vld [vmem:[#allocation2 + $0x318] sm:$0xff]
    %v141 = vld [vmem:[#allocation2 + $0x320] sm:$0xff]
    %v142 = vld [vmem:[#allocation2 + $0x328] sm:$0xff]
    %v143 = vld [vmem:[#allocation2 + $0x330] sm:$0xff]
    %v144 = vld [vmem:[#allocation2 + $0x338] sm:$0xff]
    %v145 = vld [vmem:[#allocation2 + $0x340] sm:$0xff]
    %v146 = vld [vmem:[#allocation2 + $0x348] sm:$0xff]
    %v147 = vld [vmem:[#allocation2 + $0x350] sm:$0xff]
    %v148 = vld [vmem:[#allocation2 + $0x358] sm:$0xff]
    %v149 = vld [vmem:[#allocation2 + $0x360] sm:$0xff]
    %v150 = vld [vmem:[#allocation2 + $0x368] sm:$0xff]
    %v151 = vld [vmem:[#allocation2 + $0x370] sm:$0xff]
    %v152 = vld [vmem:[#allocation2 + $0x378] sm:$0xff]
    %v153 = vld [vmem:[#allocation2 + $0x380] sm:$0xff]
    %v154 = vld [vmem:[#allocation2 + $0x388] sm:$0xff]
    %v155 = vld [vmem:[#allocation2 + $0x390] sm:$0xff]
    %v156 = vld [vmem:[#allocation2 + $0x398] sm:$0xff]
    %v157 = vld [vmem:[#allocation2 + $0x3a0] sm:$0xff]
    %v158 = vld [vmem:[#allocation2 + $0x3a8] sm:$0xff]
    %v159 = vld [vmem:[#allocation2 + $0x3b0] sm:$0xff]
    %v160 = vld [vmem:[#allocation2 + $0x3b8] sm:$0xff]
    %v161 = vld [vmem:[#allocation2 + $0x3c0] sm:$0xff]
    %v162 = vld [vmem:[#allocation2 + $0x3c8] sm:$0xff]
    %v163 = vld [vmem:[#allocation2 + $0x3d0] sm:$0xff]
    %v164 = vld [vmem:[#allocation2 + $0x3d8] sm:$0xff]
    %v165 = vld [vmem:[#allocation2 + $0x3e0] sm:$0xff]
    %v166 = vld [vmem:[#allocation2 + $0x3e8] sm:$0xff]
    %v167 = vld [vmem:[#allocation2 + $0x3f0] sm:$0xff]
    %v168 = vld [vmem:[#allocation2 + $0x3f8] sm:$0xff]
    %v169 = vld [vmem:[#allocation2 + $0x400] sm:$0xff]
    %v170 = vld [vmem:[#allocation2 + $0x408] sm:$0xff]
    %v171 = vld [vmem:[#allocation2 + $0x410] sm:$0xff]
    %v172 = vld [vmem:[#allocation2 + $0x418] sm:$0xff]
    %v173 = vld [vmem:[#allocation2 + $0x420] sm:$0xff]
    %v174 = vld [vmem:[#allocation2 + $0x428] sm:$0xff]
    %v175 = vld [vmem:[#allocation2 + $0x430] sm:$0xff]
    %v176 = vld [vmem:[#allocation2 + $0x438] sm:$0xff]
    %v177 = vld [vmem:[#allocation2 + $0x440] sm:$0xff]
    %v178 = vld [vmem:[#allocation2 + $0x448] sm:$0xff]
    %v179 = vld [vmem:[#allocation2 + $0x450] sm:$0xff]
    %v180 = vld [vmem:[#allocation2 + $0x458] sm:$0xff]
    %v181 = vld [vmem:[#allocation2 + $0x460] sm:$0xff]
    %v182 = vld [vmem:[#allocation2 + $0x468] sm:$0xff]
    %v183 = vld [vmem:[#allocation2 + $0x470] sm:$0xff]
    %v184 = vld [vmem:[#allocation2 + $0x478] sm:$0xff]
    %v185 = vld [vmem:[#allocation2 + $0x480] sm:$0xff]
    %v186 = vld [vmem:[#allocation2 + $0x488] sm:$0xff]
    %v187 = vld [vmem:[#allocation2 + $0x490] sm:$0xff]
    %v188 = vld [vmem:[#allocation2 + $0x498] sm:$0xff]
    %v189 = vld [vmem:[#allocation2 + $0x4a0] sm:$0xff]
    %v190 = vld [vmem:[#allocation2 + $0x4a8] sm:$0xff]
    %v191 = vld [vmem:[#allocation2 + $0x4b0] sm:$0xff]
    %v192 = vld [vmem:[#allocation2 + $0x4b8] sm:$0xff]
    %v193 = vld [vmem:[#allocation2 + $0x4c0] sm:$0xff]
    %v194 = vld [vmem:[#allocation2 + $0x4c8] sm:$0xff]
    %v195 = vld [vmem:[#allocation2 + $0x4d0] sm:$0xff]
    %v196 = vld [vmem:[#allocation2 + $0x4d8] sm:$0xff]
    %v197 = vld [vmem:[#allocation2 + $0x4e0] sm:$0xff]
    %v198 = vld [vmem:[#allocation2 + $0x4e8] sm:$0xff]
    %v199 = vld [vmem:[#allocation2 + $0x4f0] sm:$0xff]
    %v200 = vld [vmem:[#allocation2 + $0x4f8] sm:$0xff]
    %v201 = vld [vmem:[#allocation2 + $0x500] sm:$0xff]
    %v202 = vld [vmem:[#allocation2 + $0x508] sm:$0xff]
    %v203 = vld [vmem:[#allocation2 + $0x510] sm:$0xff]
    %v204 = vld [vmem:[#allocation2 + $0x518] sm:$0xff]
    %v205 = vld [vmem:[#allocation2 + $0x520] sm:$0xff]
    %v206 = vld [vmem:[#allocation2 + $0x528] sm:$0xff]
    %v207 = vld [vmem:[#allocation2 + $0x530] sm:$0xff]
    %v208 = vld [vmem:[#allocation2 + $0x538] sm:$0xff]
    %v209 = vld [vmem:[#allocation2 + $0x540] sm:$0xff]
    %v210 = vld [vmem:[#allocation2 + $0x548] sm:$0xff]
    %v211 = vld [vmem:[#allocation2 + $0x550] sm:$0xff]
    %v212 = vld [vmem:[#allocation2 + $0x558] sm:$0xff]
    %v213 = vld [vmem:[#allocation2 + $0x560] sm:$0xff]
    %v214 = vld [vmem:[#allocation2 + $0x568] sm:$0xff]
    %v215 = vld [vmem:[#allocation2 + $0x570] sm:$0xff]
    %v216 = vld [vmem:[#allocation2 + $0x578] sm:$0xff]
    %v217 = vld [vmem:[#allocation2 + $0x580] sm:$0xff]
    %v218 = vld [vmem:[#allocation2 + $0x588] sm:$0xff]
    %v219 = vld [vmem:[#allocation2 + $0x590] sm:$0xff]
    %v220 = vld [vmem:[#allocation2 + $0x598] sm:$0xff]
    %v221 = vld [vmem:[#allocation2 + $0x5a0] sm:$0xff]
    %v222 = vld [vmem:[#allocation2 + $0x5a8] sm:$0xff]
    %v223 = vld [vmem:[#allocation2 + $0x5b0] sm:$0xff]
    %v224 = vld [vmem:[#allocation2 + $0x5b8] sm:$0xff]
    %v225 = vld [vmem:[#allocation2 + $0x5c0] sm:$0xff]
    %v226 = vld [vmem:[#allocation2 + $0x5c8] sm:$0xff]
    %v227 = vld [vmem:[#allocation2 + $0x5d0] sm:$0xff]
    %v228 = vld [vmem:[#allocation2 + $0x5d8] sm:$0xff]
    %v229 = vld [vmem:[#allocation2 + $0x5e0] sm:$0xff]
    %v230 = vld [vmem:[#allocation2 + $0x5e8] sm:$0xff]
    %v231 = vld [vmem:[#allocation2 + $0x5f0] sm:$0xff]
    %v232 = vld [vmem:[#allocation2 + $0x5f8] sm:$0xff]
    %v233 = vld [vmem:[#allocation2 + $0x600] sm:$0xff]
    %v234 = vld [vmem:[#allocation2 + $0x608] sm:$0xff]
    %v235 = vld [vmem:[#allocation2 + $0x610] sm:$0xff]
    %v236 = vld [vmem:[#allocation2 + $0x618] sm:$0xff]
    %v237 = vld [vmem:[#allocation2 + $0x620] sm:$0xff]
    %v238 = vld [vmem:[#allocation2 + $0x628] sm:$0xff]
    %v239 = vld [vmem:[#allocation2 + $0x630] sm:$0xff]
    %v240 = vld [vmem:[#allocation2 + $0x638] sm:$0xff]
    %v241 = vld [vmem:[#allocation2 + $0x640] sm:$0xff]
    %v242 = vld [vmem:[#allocation2 + $0x648] sm:$0xff]
    %v243 = vld [vmem:[#allocation2 + $0x650] sm:$0xff]
    %v244 = vld [vmem:[#allocation2 + $0x658] sm:$0xff]
    %v245 = vld [vmem:[#allocation2 + $0x660] sm:$0xff]
    %v246 = vld [vmem:[#allocation2 + $0x668] sm:$0xff]
    %v247 = vld [vmem:[#allocation2 + $0x670] sm:$0xff]
    %v248 = vld [vmem:[#allocation2 + $0x678] sm:$0xff]
    %v249 = vld [vmem:[#allocation2 + $0x680] sm:$0xff]
    %v250 = vld [vmem:[#allocation2 + $0x688] sm:$0xff]
    %v251 = vld [vmem:[#allocation2 + $0x690] sm:$0xff]
    %v252 = vld [vmem:[#allocation2 + $0x698] sm:$0xff]
    %v253 = vld [vmem:[#allocation2 + $0x6a0] sm:$0xff]
    %v254 = vld [vmem:[#allocation2 + $0x6a8] sm:$0xff]
    %v255 = vld [vmem:[#allocation2 + $0x6b0] sm:$0xff]
    %v256 = vld [vmem:[#allocation2 + $0x6b8] sm:$0xff]
    %v257 = vld [vmem:[#allocation2 + $0x6c0] sm:$0xff]
    %v258 = vld [vmem:[#allocation2 + $0x6c8] sm:$0xff]
    %v259 = vld [vmem:[#allocation2 + $0x6d0] sm:$0xff]
    %v260 = vld [vmem:[#allocation2 + $0x6d8] sm:$0xff]
    %v261 = vld [vmem:[#allocation2 + $0x6e0] sm:$0xff]
    %v262 = vld [vmem:[#allocation2 + $0x6e8] sm:$0xff]
    %v263 = vld [vmem:[#allocation2 + $0x6f0] sm:$0xff]
    %v264 = vld [vmem:[#allocation2 + $0x6f8] sm:$0xff]
    %v265 = vld [vmem:[#allocation2 + $0x700] sm:$0xff]
    %v266 = vld [vmem:[#allocation2 + $0x708] sm:$0xff]
    %v267 = vld [vmem:[#allocation2 + $0x710] sm:$0xff]
    %v268 = vld [vmem:[#allocation2 + $0x718] sm:$0xff]
    %v269 = vld [vmem:[#allocation2 + $0x720] sm:$0xff]
    %v270 = vld [vmem:[#allocation2 + $0x728] sm:$0xff]
    %v271 = vld [vmem:[#allocation2 + $0x730] sm:$0xff]
    %v272 = vld [vmem:[#allocation2 + $0x738] sm:$0xff]
    %v273 = vld [vmem:[#allocation2 + $0x740] sm:$0xff]
    %v274 = vld [vmem:[#allocation2 + $0x748] sm:$0xff]
    %v275 = vld [vmem:[#allocation2 + $0x750] sm:$0xff]
    %v276 = vld [vmem:[#allocation2 + $0x758] sm:$0xff]
    %v277 = vld [vmem:[#allocation2 + $0x760] sm:$0xff]
    %v278 = vld [vmem:[#allocation2 + $0x768] sm:$0xff]
    %v279 = vld [vmem:[#allocation2 + $0x770] sm:$0xff]
    %v280 = vld [vmem:[#allocation2 + $0x778] sm:$0xff]
    %v281 = vld [vmem:[#allocation2 + $0x780] sm:$0xff]
    %v282 = vld [vmem:[#allocation2 + $0x788] sm:$0xff]
    %v283 = vld [vmem:[#allocation2 + $0x790] sm:$0xff]
    %v284 = vld [vmem:[#allocation2 + $0x798] sm:$0xff]
    %v285 = vld [vmem:[#allocation2 + $0x7a0] sm:$0xff]
    %v286 = vld [vmem:[#allocation2 + $0x7a8] sm:$0xff]
    %v287 = vld [vmem:[#allocation2 + $0x7b0] sm:$0xff]
    %v288 = vld [vmem:[#allocation2 + $0x7b8] sm:$0xff]
    %v289 = vld [vmem:[#allocation2 + $0x7c0] sm:$0xff]
    %v290 = vld [vmem:[#allocation2 + $0x7c8] sm:$0xff]
    %v291 = vld [vmem:[#allocation2 + $0x7d0] sm:$0xff]
    %v292 = vld [vmem:[#allocation2 + $0x7d8] sm:$0xff]
    %v293 = vld [vmem:[#allocation2 + $0x7e0] sm:$0xff]
    %v294 = vld [vmem:[#allocation2 + $0x7e8] sm:$0xff]
    %v295 = vld [vmem:[#allocation2 + $0x7f0] sm:$0xff]
    %v296 = vld [vmem:[#allocation2 + $0x7f8] sm:$0xff]
    %v297 = vmul.bf16 %v41, 1056980736
    %v298 = vmul.bf16 %v42, 1056980736
    %v299 = vmul.bf16 %v43, 1056980736
    %v300 = vmul.bf16 %v44, 1056980736
    %v301 = vmul.bf16 %v45, 1056980736
    %v302 = vmul.bf16 %v46, 1056980736
    %v303 = vmul.bf16 %v47, 1056980736
    %v304 = vmul.bf16 %v48, 1056980736
    %v305 = vmul.bf16 %v49, 1056980736
    %v306 = vmul.bf16 %v50, 1056980736
    %v307 = vmul.bf16 %v51, 1056980736
    %v308 = vmul.bf16 %v52, 1056980736
    %v309 = vmul.bf16 %v53, 1056980736
    %v310 = vmul.bf16 %v54, 1056980736
    %v311 = vmul.bf16 %v55, 1056980736
    %v312 = vmul.bf16 %v56, 1056980736
    %v313 = vmul.bf16 %v57, 1056980736
    %v314 = vmul.bf16 %v58, 1056980736
    %v315 = vmul.bf16 %v59, 1056980736
    %v316 = vmul.bf16 %v60, 1056980736
    %v317 = vmul.bf16 %v61, 1056980736
    %v318 = vmul.bf16 %v62, 1056980736
    %v319 = vmul.bf16 %v63, 1056980736
    %v320 = vmul.bf16 %v64, 1056980736
    %v321 = vmul.bf16 %v65, 1056980736
    %v322 = vmul.bf16 %v66, 1056980736
    %v323 = vmul.bf16 %v67, 1056980736
    %v324 = vmul.bf16 %v68, 1056980736
    %v325 = vmul.bf16 %v69, 1056980736
    %v326 = vmul.bf16 %v70, 1056980736
    %v327 = vmul.bf16 %v71, 1056980736
    %v328 = vmul.bf16 %v72, 1056980736
    %v329 = vmul.bf16 %v73, 1056980736
    %v330 = vmul.bf16 %v74, 1056980736
    %v331 = vmul.bf16 %v75, 1056980736
    %v332 = vmul.bf16 %v76, 1056980736
    %v333 = vmul.bf16 %v77, 1056980736
    %v334 = vmul.bf16 %v78, 1056980736
    %v335 = vmul.bf16 %v79, 1056980736
    %v336 = vmul.bf16 %v80, 1056980736
    %v337 = vmul.bf16 %v81, 1056980736
    %v338 = vmul.bf16 %v82, 1056980736
    %v339 = vmul.bf16 %v83, 1056980736
    %v340 = vmul.bf16 %v84, 1056980736
    %v341 = vmul.bf16 %v85, 1056980736
    %v342 = vmul.bf16 %v86, 1056980736
    %v343 = vmul.bf16 %v87, 1056980736
    %v344 = vmul.bf16 %v88, 1056980736
    %v345 = vmul.bf16 %v89, 1056980736
    %v346 = vmul.bf16 %v90, 1056980736
    %v347 = vmul.bf16 %v91, 1056980736
    %v348 = vmul.bf16 %v92, 1056980736
    %v349 = vmul.bf16 %v93, 1056980736
    %v350 = vmul.bf16 %v94, 1056980736
    %v351 = vmul.bf16 %v95, 1056980736
    %v352 = vmul.bf16 %v96, 1056980736
    %v353 = vmul.bf16 %v97, 1056980736
    %v354 = vmul.bf16 %v98, 1056980736
    %v355 = vmul.bf16 %v99, 1056980736
    %v356 = vmul.bf16 %v100, 1056980736
    %v357 = vmul.bf16 %v101, 1056980736
    %v358 = vmul.bf16 %v102, 1056980736
    %v359 = vmul.bf16 %v103, 1056980736
    %v360 = vmul.bf16 %v104, 1056980736
    %v361 = vmul.bf16 %v105, 1056980736
    %v362 = vmul.bf16 %v106, 1056980736
    %v363 = vmul.bf16 %v107, 1056980736
    %v364 = vmul.bf16 %v108, 1056980736
    %v365 = vmul.bf16 %v109, 1056980736
    %v366 = vmul.bf16 %v110, 1056980736
    %v367 = vmul.bf16 %v111, 1056980736
    %v368 = vmul.bf16 %v112, 1056980736
    %v369 = vmul.bf16 %v113, 1056980736
    %v370 = vmul.bf16 %v114, 1056980736
    %v371 = vmul.bf16 %v115, 1056980736
    %v372 = vmul.bf16 %v116, 1056980736
    %v373 = vmul.bf16 %v117, 1056980736
    %v374 = vmul.bf16 %v118, 1056980736
    %v375 = vmul.bf16 %v119, 1056980736
    %v376 = vmul.bf16 %v120, 1056980736
    %v377 = vmul.bf16 %v121, 1056980736
    %v378 = vmul.bf16 %v122, 1056980736
    %v379 = vmul.bf16 %v123, 1056980736
    %v380 = vmul.bf16 %v124, 1056980736
    %v381 = vmul.bf16 %v125, 1056980736
    %v382 = vmul.bf16 %v126, 1056980736
    %v383 = vmul.bf16 %v127, 1056980736
    %v384 = vmul.bf16 %v128, 1056980736
    %v385 = vmul.bf16 %v129, 1056980736
    %v386 = vmul.bf16 %v130, 1056980736
    %v387 = vmul.bf16 %v131, 1056980736
    %v388 = vmul.bf16 %v132, 1056980736
    %v389 = vmul.bf16 %v133, 1056980736
    %v390 = vmul.bf16 %v134, 1056980736
    %v391 = vmul.bf16 %v135, 1056980736
    %v392 = vmul.bf16 %v136, 1056980736
    %v393 = vmul.bf16 %v137, 1056980736
    %v394 = vmul.bf16 %v138, 1056980736
    %v395 = vmul.bf16 %v139, 1056980736
    %v396 = vmul.bf16 %v140, 1056980736
    %v397 = vmul.bf16 %v141, 1056980736
    %v398 = vmul.bf16 %v142, 1056980736
    %v399 = vmul.bf16 %v143, 1056980736
    %v400 = vmul.bf16 %v144, 1056980736
    %v401 = vmul.bf16 %v145, 1056980736
    %v402 = vmul.bf16 %v146, 1056980736
    %v403 = vmul.bf16 %v147, 1056980736
    %v404 = vmul.bf16 %v148, 1056980736
    %v405 = vmul.bf16 %v149, 1056980736
    %v406 = vmul.bf16 %v150, 1056980736
    %v407 = vmul.bf16 %v151, 1056980736
    %v408 = vmul.bf16 %v152, 1056980736
    %v409 = vmul.bf16 %v153, 1056980736
    %v410 = vmul.bf16 %v154, 1056980736
    %v411 = vmul.bf16 %v155, 1056980736
    %v412 = vmul.bf16 %v156, 1056980736
    %v413 = vmul.bf16 %v157, 1056980736
    %v414 = vmul.bf16 %v158, 1056980736
    %v415 = vmul.bf16 %v159, 1056980736
    %v416 = vmul.bf16 %v160, 1056980736
    %v417 = vmul.bf16 %v161, 1056980736
    %v418 = vmul.bf16 %v162, 1056980736
    %v419 = vmul.bf16 %v163, 1056980736
    %v420 = vmul.bf16 %v164, 1056980736
    %v421 = vmul.bf16 %v165, 1056980736
    %v422 = vmul.bf16 %v166, 1056980736
    %v423 = vmul.bf16 %v167, 1056980736
    %v424 = vmul.bf16 %v168, 1056980736
    %v425 = vmul.bf16 %v169, 1056980736
    %v426 = vmul.bf16 %v170, 1056980736
    %v427 = vmul.bf16 %v171, 1056980736
    %v428 = vmul.bf16 %v172, 1056980736
    %v429 = vmul.bf16 %v173, 1056980736
    %v430 = vmul.bf16 %v174, 1056980736
    %v431 = vmul.bf16 %v175, 1056980736
    %v432 = vmul.bf16 %v176, 1056980736
    %v433 = vmul.bf16 %v177, 1056980736
    %v434 = vmul.bf16 %v178, 1056980736
    %v435 = vmul.bf16 %v179, 1056980736
    %v436 = vmul.bf16 %v180, 1056980736
    %v437 = vmul.bf16 %v181, 1056980736
    %v438 = vmul.bf16 %v182, 1056980736
    %v439 = vmul.bf16 %v183, 1056980736
    %v440 = vmul.bf16 %v184, 1056980736
    %v441 = vmul.bf16 %v185, 1056980736
    %v442 = vmul.bf16 %v186, 1056980736
    %v443 = vmul.bf16 %v187, 1056980736
    %v444 = vmul.bf16 %v188, 1056980736
    %v445 = vmul.bf16 %v189, 1056980736
    %v446 = vmul.bf16 %v190, 1056980736
    %v447 = vmul.bf16 %v191, 1056980736
    %v448 = vmul.bf16 %v192, 1056980736
    %v449 = vmul.bf16 %v193, 1056980736
    %v450 = vmul.bf16 %v194, 1056980736
    %v451 = vmul.bf16 %v195, 1056980736
    %v452 = vmul.bf16 %v196, 1056980736
    %v453 = vmul.bf16 %v197, 1056980736
    %v454 = vmul.bf16 %v198, 1056980736
    %v455 = vmul.bf16 %v199, 1056980736
    %v456 = vmul.bf16 %v200, 1056980736
    %v457 = vmul.bf16 %v201, 1056980736
    %v458 = vmul.bf16 %v202, 1056980736
    %v459 = vmul.bf16 %v203, 1056980736
    %v460 = vmul.bf16 %v204, 1056980736
    %v461 = vmul.bf16 %v205, 1056980736
    %v462 = vmul.bf16 %v206, 1056980736
    %v463 = vmul.bf16 %v207, 1056980736
    %v464 = vmul.bf16 %v208, 1056980736
    %v465 = vmul.bf16 %v209, 1056980736
    %v466 = vmul.bf16 %v210, 1056980736
    %v467 = vmul.bf16 %v211, 1056980736
    %v468 = vmul.bf16 %v212, 1056980736
    %v469 = vmul.bf16 %v213, 1056980736
    %v470 = vmul.bf16 %v214, 1056980736
    %v471 = vmul.bf16 %v215, 1056980736
    %v472 = vmul.bf16 %v216, 1056980736
    %v473 = vmul.bf16 %v217, 1056980736
    %v474 = vmul.bf16 %v218, 1056980736
    %v475 = vmul.bf16 %v219, 1056980736
    %v476 = vmul.bf16 %v220, 1056980736
    %v477 = vmul.bf16 %v221, 1056980736
    %v478 = vmul.bf16 %v222, 1056980736
    %v479 = vmul.bf16 %v223, 1056980736
    %v480 = vmul.bf16 %v224, 1056980736
    %v481 = vmul.bf16 %v225, 1056980736
    %v482 = vmul.bf16 %v226, 1056980736
    %v483 = vmul.bf16 %v227, 1056980736
    %v484 = vmul.bf16 %v228, 1056980736
    %v485 = vmul.bf16 %v229, 1056980736
    %v486 = vmul.bf16 %v230, 1056980736
    %v487 = vmul.bf16 %v231, 1056980736
    %v488 = vmul.bf16 %v232, 1056980736
    %v489 = vmul.bf16 %v233, 1056980736
    %v490 = vmul.bf16 %v234, 1056980736
    %v491 = vmul.bf16 %v235, 1056980736
    %v492 = vmul.bf16 %v236, 1056980736
    %v493 = vmul.bf16 %v237, 1056980736
    %v494 = vmul.bf16 %v238, 1056980736
    %v495 = vmul.bf16 %v239, 1056980736
    %v496 = vmul.bf16 %v240, 1056980736
    %v497 = vmul.bf16 %v241, 1056980736
    %v498 = vmul.bf16 %v242, 1056980736
    %v499 = vmul.bf16 %v243, 1056980736
    %v500 = vmul.bf16 %v244, 1056980736
    %v501 = vmul.bf16 %v245, 1056980736
    %v502 = vmul.bf16 %v246, 1056980736
    %v503 = vmul.bf16 %v247, 1056980736
    %v504 = vmul.bf16 %v248, 1056980736
    %v505 = vmul.bf16 %v249, 1056980736
    %v506 = vmul.bf16 %v250, 1056980736
    %v507 = vmul.bf16 %v251, 1056980736
    %v508 = vmul.bf16 %v252, 1056980736
    %v509 = vmul.bf16 %v253, 1056980736
    %v510 = vmul.bf16 %v254, 1056980736
    %v511 = vmul.bf16 %v255, 1056980736
    %v512 = vmul.bf16 %v256, 1056980736
    %v513 = vmul.bf16 %v257, 1056980736
    %v514 = vmul.bf16 %v258, 1056980736
    %v515 = vmul.bf16 %v259, 1056980736
    %v516 = vmul.bf16 %v260, 1056980736
    %v517 = vmul.bf16 %v261, 1056980736
    %v518 = vmul.bf16 %v262, 1056980736
    %v519 = vmul.bf16 %v263, 1056980736
    %v520 = vmul.bf16 %v264, 1056980736
    %v521 = vmul.bf16 %v265, 1056980736
    %v522 = vmul.bf16 %v266, 1056980736
    %v523 = vmul.bf16 %v267, 1056980736
    %v524 = vmul.bf16 %v268, 1056980736
    %v525 = vmul.bf16 %v269, 1056980736
    %v526 = vmul.bf16 %v270, 1056980736
    %v527 = vmul.bf16 %v271, 1056980736
    %v528 = vmul.bf16 %v272, 1056980736
    %v529 = vmul.bf16 %v273, 1056980736
    %v530 = vmul.bf16 %v274, 1056980736
    %v531 = vmul.bf16 %v275, 1056980736
    %v532 = vmul.bf16 %v276, 1056980736
    %v533 = vmul.bf16 %v277, 1056980736
    %v534 = vmul.bf16 %v278, 1056980736
    %v535 = vmul.bf16 %v279, 1056980736
    %v536 = vmul.bf16 %v280, 1056980736
    %v537 = vmul.bf16 %v281, 1056980736
    %v538 = vmul.bf16 %v282, 1056980736
    %v539 = vmul.bf16 %v283, 1056980736
    %v540 = vmul.bf16 %v284, 1056980736
    %v541 = vmul.bf16 %v285, 1056980736
    %v542 = vmul.bf16 %v286, 1056980736
    %v543 = vmul.bf16 %v287, 1056980736
    %v544 = vmul.bf16 %v288, 1056980736
    %v545 = vmul.bf16 %v289, 1056980736
    %v546 = vmul.bf16 %v290, 1056980736
    %v547 = vmul.bf16 %v291, 1056980736
    %v548 = vmul.bf16 %v292, 1056980736
    %v549 = vmul.bf16 %v293, 1056980736
    %v550 = vmul.bf16 %v294, 1056980736
    %v551 = vmul.bf16 %v295, 1056980736
    %v552 = vmul.bf16 %v296, 1056980736
    %v553 = vld [vmem:[#allocation5] sm:$0xff]
    %v554 = vld [vmem:[#allocation5 + $0x8] sm:$0xff]
    %v555 = vld [vmem:[#allocation5 + $0x10] sm:$0xff]
    %v556 = vld [vmem:[#allocation5 + $0x18] sm:$0xff]
    %v557 = vld [vmem:[#allocation5 + $0x20] sm:$0xff]
    %v558 = vld [vmem:[#allocation5 + $0x28] sm:$0xff]
    %v559 = vld [vmem:[#allocation5 + $0x30] sm:$0xff]
    %v560 = vld [vmem:[#allocation5 + $0x38] sm:$0xff]
    %v561 = vld [vmem:[#allocation5 + $0x40] sm:$0xff]
    %v562 = vld [vmem:[#allocation5 + $0x48] sm:$0xff]
    %v563 = vld [vmem:[#allocation5 + $0x50] sm:$0xff]
    %v564 = vld [vmem:[#allocation5 + $0x58] sm:$0xff]
    %v565 = vld [vmem:[#allocation5 + $0x60] sm:$0xff]
    %v566 = vld [vmem:[#allocation5 + $0x68] sm:$0xff]
    %v567 = vld [vmem:[#allocation5 + $0x70] sm:$0xff]
    %v568 = vld [vmem:[#allocation5 + $0x78] sm:$0xff]
    %v569 = vld [vmem:[#allocation5 + $0x80] sm:$0xff]
    %v570 = vld [vmem:[#allocation5 + $0x88] sm:$0xff]
    %v571 = vld [vmem:[#allocation5 + $0x90] sm:$0xff]
    %v572 = vld [vmem:[#allocation5 + $0x98] sm:$0xff]
    %v573 = vld [vmem:[#allocation5 + $0xa0] sm:$0xff]
    %v574 = vld [vmem:[#allocation5 + $0xa8] sm:$0xff]
    %v575 = vld [vmem:[#allocation5 + $0xb0] sm:$0xff]
    %v576 = vld [vmem:[#allocation5 + $0xb8] sm:$0xff]
    %v577 = vld [vmem:[#allocation5 + $0xc0] sm:$0xff]
    %v578 = vld [vmem:[#allocation5 + $0xc8] sm:$0xff]
    %v579 = vld [vmem:[#allocation5 + $0xd0] sm:$0xff]
    %v580 = vld [vmem:[#allocation5 + $0xd8] sm:$0xff]
    %v581 = vld [vmem:[#allocation5 + $0xe0] sm:$0xff]
    %v582 = vld [vmem:[#allocation5 + $0xe8] sm:$0xff]
    %v583 = vld [vmem:[#allocation5 + $0xf0] sm:$0xff]
    %v584 = vld [vmem:[#allocation5 + $0xf8] sm:$0xff]
    %v585 = vld [vmem:[#allocation5 + $0x100] sm:$0xff]
    %v586 = vld [vmem:[#allocation5 + $0x108] sm:$0xff]
    %v587 = vld [vmem:[#allocation5 + $0x110] sm:$0xff]
    %v588 = vld [vmem:[#allocation5 + $0x118] sm:$0xff]
    %v589 = vld [vmem:[#allocation5 + $0x120] sm:$0xff]
    %v590 = vld [vmem:[#allocation5 + $0x128] sm:$0xff]
    %v591 = vld [vmem:[#allocation5 + $0x130] sm:$0xff]
    %v592 = vld [vmem:[#allocation5 + $0x138] sm:$0xff]
    %v593 = vld [vmem:[#allocation5 + $0x140] sm:$0xff]
    %v594 = vld [vmem:[#allocation5 + $0x148] sm:$0xff]
    %v595 = vld [vmem:[#allocation5 + $0x150] sm:$0xff]
    %v596 = vld [vmem:[#allocation5 + $0x158] sm:$0xff]
    %v597 = vld [vmem:[#allocation5 + $0x160] sm:$0xff]
    %v598 = vld [vmem:[#allocation5 + $0x168] sm:$0xff]
    %v599 = vld [vmem:[#allocation5 + $0x170] sm:$0xff]
    %v600 = vld [vmem:[#allocation5 + $0x178] sm:$0xff]
    %v601 = vld [vmem:[#allocation5 + $0x180] sm:$0xff]
    %v602 = vld [vmem:[#allocation5 + $0x188] sm:$0xff]
    %v603 = vld [vmem:[#allocation5 + $0x190] sm:$0xff]
    %v604 = vld [vmem:[#allocation5 + $0x198] sm:$0xff]
    %v605 = vld [vmem:[#allocation5 + $0x1a0] sm:$0xff]
    %v606 = vld [vmem:[#allocation5 + $0x1a8] sm:$0xff]
    %v607 = vld [vmem:[#allocation5 + $0x1b0] sm:$0xff]
    %v608 = vld [vmem:[#allocation5 + $0x1b8] sm:$0xff]
    %v609 = vld [vmem:[#allocation5 + $0x1c0] sm:$0xff]
    %v610 = vld [vmem:[#allocation5 + $0x1c8] sm:$0xff]
    %v611 = vld [vmem:[#allocation5 + $0x1d0] sm:$0xff]
    %v612 = vld [vmem:[#allocation5 + $0x1d8] sm:$0xff]
    %v613 = vld [vmem:[#allocation5 + $0x1e0] sm:$0xff]
    %v614 = vld [vmem:[#allocation5 + $0x1e8] sm:$0xff]
    %v615 = vld [vmem:[#allocation5 + $0x1f0] sm:$0xff]
    %v616 = vld [vmem:[#allocation5 + $0x1f8] sm:$0xff]
    %v617 = vld [vmem:[#allocation5 + $0x200] sm:$0xff]
    %v618 = vld [vmem:[#allocation5 + $0x208] sm:$0xff]
    %v619 = vld [vmem:[#allocation5 + $0x210] sm:$0xff]
    %v620 = vld [vmem:[#allocation5 + $0x218] sm:$0xff]
    %v621 = vld [vmem:[#allocation5 + $0x220] sm:$0xff]
    %v622 = vld [vmem:[#allocation5 + $0x228] sm:$0xff]
    %v623 = vld [vmem:[#allocation5 + $0x230] sm:$0xff]
    %v624 = vld [vmem:[#allocation5 + $0x238] sm:$0xff]
    %v625 = vld [vmem:[#allocation5 + $0x240] sm:$0xff]
    %v626 = vld [vmem:[#allocation5 + $0x248] sm:$0xff]
    %v627 = vld [vmem:[#allocation5 + $0x250] sm:$0xff]
    %v628 = vld [vmem:[#allocation5 + $0x258] sm:$0xff]
    %v629 = vld [vmem:[#allocation5 + $0x260] sm:$0xff]
    %v630 = vld [vmem:[#allocation5 + $0x268] sm:$0xff]
    %v631 = vld [vmem:[#allocation5 + $0x270] sm:$0xff]
    %v632 = vld [vmem:[#allocation5 + $0x278] sm:$0xff]
    %v633 = vld [vmem:[#allocation5 + $0x280] sm:$0xff]
    %v634 = vld [vmem:[#allocation5 + $0x288] sm:$0xff]
    %v635 = vld [vmem:[#allocation5 + $0x290] sm:$0xff]
    %v636 = vld [vmem:[#allocation5 + $0x298] sm:$0xff]
    %v637 = vld [vmem:[#allocation5 + $0x2a0] sm:$0xff]
    %v638 = vld [vmem:[#allocation5 + $0x2a8] sm:$0xff]
    %v639 = vld [vmem:[#allocation5 + $0x2b0] sm:$0xff]
    %v640 = vld [vmem:[#allocation5 + $0x2b8] sm:$0xff]
    %v641 = vld [vmem:[#allocation5 + $0x2c0] sm:$0xff]
    %v642 = vld [vmem:[#allocation5 + $0x2c8] sm:$0xff]
    %v643 = vld [vmem:[#allocation5 + $0x2d0] sm:$0xff]
    %v644 = vld [vmem:[#allocation5 + $0x2d8] sm:$0xff]
    %v645 = vld [vmem:[#allocation5 + $0x2e0] sm:$0xff]
    %v646 = vld [vmem:[#allocation5 + $0x2e8] sm:$0xff]
    %v647 = vld [vmem:[#allocation5 + $0x2f0] sm:$0xff]
    %v648 = vld [vmem:[#allocation5 + $0x2f8] sm:$0xff]
    %v649 = vld [vmem:[#allocation5 + $0x300] sm:$0xff]
    %v650 = vld [vmem:[#allocation5 + $0x308] sm:$0xff]
    %v651 = vld [vmem:[#allocation5 + $0x310] sm:$0xff]
    %v652 = vld [vmem:[#allocation5 + $0x318] sm:$0xff]
    %v653 = vld [vmem:[#allocation5 + $0x320] sm:$0xff]
    %v654 = vld [vmem:[#allocation5 + $0x328] sm:$0xff]
    %v655 = vld [vmem:[#allocation5 + $0x330] sm:$0xff]
    %v656 = vld [vmem:[#allocation5 + $0x338] sm:$0xff]
    %v657 = vld [vmem:[#allocation5 + $0x340] sm:$0xff]
    %v658 = vld [vmem:[#allocation5 + $0x348] sm:$0xff]
    %v659 = vld [vmem:[#allocation5 + $0x350] sm:$0xff]
    %v660 = vld [vmem:[#allocation5 + $0x358] sm:$0xff]
    %v661 = vld [vmem:[#allocation5 + $0x360] sm:$0xff]
    %v662 = vld [vmem:[#allocation5 + $0x368] sm:$0xff]
    %v663 = vld [vmem:[#allocation5 + $0x370] sm:$0xff]
    %v664 = vld [vmem:[#allocation5 + $0x378] sm:$0xff]
    %v665 = vld [vmem:[#allocation5 + $0x380] sm:$0xff]
    %v666 = vld [vmem:[#allocation5 + $0x388] sm:$0xff]
    %v667 = vld [vmem:[#allocation5 + $0x390] sm:$0xff]
    %v668 = vld [vmem:[#allocation5 + $0x398] sm:$0xff]
    %v669 = vld [vmem:[#allocation5 + $0x3a0] sm:$0xff]
    %v670 = vld [vmem:[#allocation5 + $0x3a8] sm:$0xff]
    %v671 = vld [vmem:[#allocation5 + $0x3b0] sm:$0xff]
    %v672 = vld [vmem:[#allocation5 + $0x3b8] sm:$0xff]
    %v673 = vld [vmem:[#allocation5 + $0x3c0] sm:$0xff]
    %v674 = vld [vmem:[#allocation5 + $0x3c8] sm:$0xff]
    %v675 = vld [vmem:[#allocation5 + $0x3d0] sm:$0xff]
    %v676 = vld [vmem:[#allocation5 + $0x3d8] sm:$0xff]
    %v677 = vld [vmem:[#allocation5 + $0x3e0] sm:$0xff]
    %v678 = vld [vmem:[#allocation5 + $0x3e8] sm:$0xff]
    %v679 = vld [vmem:[#allocation5 + $0x3f0] sm:$0xff]
    %v680 = vld [vmem:[#allocation5 + $0x3f8] sm:$0xff]
    %v681 = vld [vmem:[#allocation5 + $0x400] sm:$0xff]
    %v682 = vld [vmem:[#allocation5 + $0x408] sm:$0xff]
    %v683 = vld [vmem:[#allocation5 + $0x410] sm:$0xff]
    %v684 = vld [vmem:[#allocation5 + $0x418] sm:$0xff]
    %v685 = vld [vmem:[#allocation5 + $0x420] sm:$0xff]
    %v686 = vld [vmem:[#allocation5 + $0x428] sm:$0xff]
    %v687 = vld [vmem:[#allocation5 + $0x430] sm:$0xff]
    %v688 = vld [vmem:[#allocation5 + $0x438] sm:$0xff]
    %v689 = vld [vmem:[#allocation5 + $0x440] sm:$0xff]
    %v690 = vld [vmem:[#allocation5 + $0x448] sm:$0xff]
    %v691 = vld [vmem:[#allocation5 + $0x450] sm:$0xff]
    %v692 = vld [vmem:[#allocation5 + $0x458] sm:$0xff]
    %v693 = vld [vmem:[#allocation5 + $0x460] sm:$0xff]
    %v694 = vld [vmem:[#allocation5 + $0x468] sm:$0xff]
    %v695 = vld [vmem:[#allocation5 + $0x470] sm:$0xff]
    %v696 = vld [vmem:[#allocation5 + $0x478] sm:$0xff]
    %v697 = vld [vmem:[#allocation5 + $0x480] sm:$0xff]
    %v698 = vld [vmem:[#allocation5 + $0x488] sm:$0xff]
    %v699 = vld [vmem:[#allocation5 + $0x490] sm:$0xff]
    %v700 = vld [vmem:[#allocation5 + $0x498] sm:$0xff]
    %v701 = vld [vmem:[#allocation5 + $0x4a0] sm:$0xff]
    %v702 = vld [vmem:[#allocation5 + $0x4a8] sm:$0xff]
    %v703 = vld [vmem:[#allocation5 + $0x4b0] sm:$0xff]
    %v704 = vld [vmem:[#allocation5 + $0x4b8] sm:$0xff]
    %v705 = vld [vmem:[#allocation5 + $0x4c0] sm:$0xff]
    %v706 = vld [vmem:[#allocation5 + $0x4c8] sm:$0xff]
    %v707 = vld [vmem:[#allocation5 + $0x4d0] sm:$0xff]
    %v708 = vld [vmem:[#allocation5 + $0x4d8] sm:$0xff]
    %v709 = vld [vmem:[#allocation5 + $0x4e0] sm:$0xff]
    %v710 = vld [vmem:[#allocation5 + $0x4e8] sm:$0xff]
    %v711 = vld [vmem:[#allocation5 + $0x4f0] sm:$0xff]
    %v712 = vld [vmem:[#allocation5 + $0x4f8] sm:$0xff]
    %v713 = vld [vmem:[#allocation5 + $0x500] sm:$0xff]
    %v714 = vld [vmem:[#allocation5 + $0x508] sm:$0xff]
    %v715 = vld [vmem:[#allocation5 + $0x510] sm:$0xff]
    %v716 = vld [vmem:[#allocation5 + $0x518] sm:$0xff]
    %v717 = vld [vmem:[#allocation5 + $0x520] sm:$0xff]
    %v718 = vld [vmem:[#allocation5 + $0x528] sm:$0xff]
    %v719 = vld [vmem:[#allocation5 + $0x530] sm:$0xff]
    %v720 = vld [vmem:[#allocation5 + $0x538] sm:$0xff]
    %v721 = vld [vmem:[#allocation5 + $0x540] sm:$0xff]
    %v722 = vld [vmem:[#allocation5 + $0x548] sm:$0xff]
    %v723 = vld [vmem:[#allocation5 + $0x550] sm:$0xff]
    %v724 = vld [vmem:[#allocation5 + $0x558] sm:$0xff]
    %v725 = vld [vmem:[#allocation5 + $0x560] sm:$0xff]
    %v726 = vld [vmem:[#allocation5 + $0x568] sm:$0xff]
    %v727 = vld [vmem:[#allocation5 + $0x570] sm:$0xff]
    %v728 = vld [vmem:[#allocation5 + $0x578] sm:$0xff]
    %v729 = vld [vmem:[#allocation5 + $0x580] sm:$0xff]
    %v730 = vld [vmem:[#allocation5 + $0x588] sm:$0xff]
    %v731 = vld [vmem:[#allocation5 + $0x590] sm:$0xff]
    %v732 = vld [vmem:[#allocation5 + $0x598] sm:$0xff]
    %v733 = vld [vmem:[#allocation5 + $0x5a0] sm:$0xff]
    %v734 = vld [vmem:[#allocation5 + $0x5a8] sm:$0xff]
    %v735 = vld [vmem:[#allocation5 + $0x5b0] sm:$0xff]
    %v736 = vld [vmem:[#allocation5 + $0x5b8] sm:$0xff]
    %v737 = vld [vmem:[#allocation5 + $0x5c0] sm:$0xff]
    %v738 = vld [vmem:[#allocation5 + $0x5c8] sm:$0xff]
    %v739 = vld [vmem:[#allocation5 + $0x5d0] sm:$0xff]
    %v740 = vld [vmem:[#allocation5 + $0x5d8] sm:$0xff]
    %v741 = vld [vmem:[#allocation5 + $0x5e0] sm:$0xff]
    %v742 = vld [vmem:[#allocation5 + $0x5e8] sm:$0xff]
    %v743 = vld [vmem:[#allocation5 + $0x5f0] sm:$0xff]
    %v744 = vld [vmem:[#allocation5 + $0x5f8] sm:$0xff]
    %v745 = vld [vmem:[#allocation5 + $0x600] sm:$0xff]
    %v746 = vld [vmem:[#allocation5 + $0x608] sm:$0xff]
    %v747 = vld [vmem:[#allocation5 + $0x610] sm:$0xff]
    %v748 = vld [vmem:[#allocation5 + $0x618] sm:$0xff]
    %v749 = vld [vmem:[#allocation5 + $0x620] sm:$0xff]
    %v750 = vld [vmem:[#allocation5 + $0x628] sm:$0xff]
    %v751 = vld [vmem:[#allocation5 + $0x630] sm:$0xff]
    %v752 = vld [vmem:[#allocation5 + $0x638] sm:$0xff]
    %v753 = vld [vmem:[#allocation5 + $0x640] sm:$0xff]
    %v754 = vld [vmem:[#allocation5 + $0x648] sm:$0xff]
    %v755 = vld [vmem:[#allocation5 + $0x650] sm:$0xff]
    %v756 = vld [vmem:[#allocation5 + $0x658] sm:$0xff]
    %v757 = vld [vmem:[#allocation5 + $0x660] sm:$0xff]
    %v758 = vld [vmem:[#allocation5 + $0x668] sm:$0xff]
    %v759 = vld [vmem:[#allocation5 + $0x670] sm:$0xff]
    %v760 = vld [vmem:[#allocation5 + $0x678] sm:$0xff]
    %v761 = vld [vmem:[#allocation5 + $0x680] sm:$0xff]
    %v762 = vld [vmem:[#allocation5 + $0x688] sm:$0xff]
    %v763 = vld [vmem:[#allocation5 + $0x690] sm:$0xff]
    %v764 = vld [vmem:[#allocation5 + $0x698] sm:$0xff]
    %v765 = vld [vmem:[#allocation5 + $0x6a0] sm:$0xff]
    %v766 = vld [vmem:[#allocation5 + $0x6a8] sm:$0xff]
    %v767 = vld [vmem:[#allocation5 + $0x6b0] sm:$0xff]
    %v768 = vld [vmem:[#allocation5 + $0x6b8] sm:$0xff]
    %v769 = vld [vmem:[#allocation5 + $0x6c0] sm:$0xff]
    %v770 = vld [vmem:[#allocation5 + $0x6c8] sm:$0xff]
    %v771 = vld [vmem:[#allocation5 + $0x6d0] sm:$0xff]
    %v772 = vld [vmem:[#allocation5 + $0x6d8] sm:$0xff]
    %v773 = vld [vmem:[#allocation5 + $0x6e0] sm:$0xff]
    %v774 = vld [vmem:[#allocation5 + $0x6e8] sm:$0xff]
    %v775 = vld [vmem:[#allocation5 + $0x6f0] sm:$0xff]
    %v776 = vld [vmem:[#allocation5 + $0x6f8] sm:$0xff]
    %v777 = vld [vmem:[#allocation5 + $0x700] sm:$0xff]
    %v778 = vld [vmem:[#allocation5 + $0x708] sm:$0xff]
    %v779 = vld [vmem:[#allocation5 + $0x710] sm:$0xff]
    %v780 = vld [vmem:[#allocation5 + $0x718] sm:$0xff]
    %v781 = vld [vmem:[#allocation5 + $0x720] sm:$0xff]
    %v782 = vld [vmem:[#allocation5 + $0x728] sm:$0xff]
    %v783 = vld [vmem:[#allocation5 + $0x730] sm:$0xff]
    %v784 = vld [vmem:[#allocation5 + $0x738] sm:$0xff]
    %v785 = vld [vmem:[#allocation5 + $0x740] sm:$0xff]
    %v786 = vld [vmem:[#allocation5 + $0x748] sm:$0xff]
    %v787 = vld [vmem:[#allocation5 + $0x750] sm:$0xff]
    %v788 = vld [vmem:[#allocation5 + $0x758] sm:$0xff]
    %v789 = vld [vmem:[#allocation5 + $0x760] sm:$0xff]
    %v790 = vld [vmem:[#allocation5 + $0x768] sm:$0xff]
    %v791 = vld [vmem:[#allocation5 + $0x770] sm:$0xff]
    %v792 = vld [vmem:[#allocation5 + $0x778] sm:$0xff]
    %v793 = vld [vmem:[#allocation5 + $0x780] sm:$0xff]
    %v794 = vld [vmem:[#allocation5 + $0x788] sm:$0xff]
    %v795 = vld [vmem:[#allocation5 + $0x790] sm:$0xff]
    %v796 = vld [vmem:[#allocation5 + $0x798] sm:$0xff]
    %v797 = vld [vmem:[#allocation5 + $0x7a0] sm:$0xff]
    %v798 = vld [vmem:[#allocation5 + $0x7a8] sm:$0xff]
    %v799 = vld [vmem:[#allocation5 + $0x7b0] sm:$0xff]
    %v800 = vld [vmem:[#allocation5 + $0x7b8] sm:$0xff]
    %v801 = vld [vmem:[#allocation5 + $0x7c0] sm:$0xff]
    %v802 = vld [vmem:[#allocation5 + $0x7c8] sm:$0xff]
    %v803 = vld [vmem:[#allocation5 + $0x7d0] sm:$0xff]
    %v804 = vld [vmem:[#allocation5 + $0x7d8] sm:$0xff]
    %v805 = vld [vmem:[#allocation5 + $0x7e0] sm:$0xff]
    %v806 = vld [vmem:[#allocation5 + $0x7e8] sm:$0xff]
    %v807 = vld [vmem:[#allocation5 + $0x7f0] sm:$0xff]
    %v808 = vld [vmem:[#allocation5 + $0x7f8] sm:$0xff]
    %v809 = vmul.bf16 %v553, 1056980736
    %v810 = vmul.bf16 %v554, 1056980736
    %v811 = vmul.bf16 %v555, 1056980736
    %v812 = vmul.bf16 %v556, 1056980736
    %v813 = vmul.bf16 %v557, 1056980736
    %v814 = vmul.bf16 %v558, 1056980736
    %v815 = vmul.bf16 %v559, 1056980736
    %v816 = vmul.bf16 %v560, 1056980736
    %v817 = vmul.bf16 %v561, 1056980736
    %v818 = vmul.bf16 %v562, 1056980736
    %v819 = vmul.bf16 %v563, 1056980736
    %v820 = vmul.bf16 %v564, 1056980736
    %v821 = vmul.bf16 %v565, 1056980736
    %v822 = vmul.bf16 %v566, 1056980736
    %v823 = vmul.bf16 %v567, 1056980736
    %v824 = vmul.bf16 %v568, 1056980736
    %v825 = vmul.bf16 %v569, 1056980736
    %v826 = vmul.bf16 %v570, 1056980736
    %v827 = vmul.bf16 %v571, 1056980736
    %v828 = vmul.bf16 %v572, 1056980736
    %v829 = vmul.bf16 %v573, 1056980736
    %v830 = vmul.bf16 %v574, 1056980736
    %v831 = vmul.bf16 %v575, 1056980736
    %v832 = vmul.bf16 %v576, 1056980736
    %v833 = vmul.bf16 %v577, 1056980736
    %v834 = vmul.bf16 %v578, 1056980736
    %v835 = vmul.bf16 %v579, 1056980736
    %v836 = vmul.bf16 %v580, 1056980736
    %v837 = vmul.bf16 %v581, 1056980736
    %v838 = vmul.bf16 %v582, 1056980736
    %v839 = vmul.bf16 %v583, 1056980736
    %v840 = vmul.bf16 %v584, 1056980736
    %v841 = vmul.bf16 %v585, 1056980736
    %v842 = vmul.bf16 %v586, 1056980736
    %v843 = vmul.bf16 %v587, 1056980736
    %v844 = vmul.bf16 %v588, 1056980736
    %v845 = vmul.bf16 %v589, 1056980736
    %v846 = vmul.bf16 %v590, 1056980736
    %v847 = vmul.bf16 %v591, 1056980736
    %v848 = vmul.bf16 %v592, 1056980736
    %v849 = vmul.bf16 %v593, 1056980736
    %v850 = vmul.bf16 %v594, 1056980736
    %v851 = vmul.bf16 %v595, 1056980736
    %v852 = vmul.bf16 %v596, 1056980736
    %v853 = vmul.bf16 %v597, 1056980736
    %v854 = vmul.bf16 %v598, 1056980736
    %v855 = vmul.bf16 %v599, 1056980736
    %v856 = vmul.bf16 %v600, 1056980736
    %v857 = vmul.bf16 %v601, 1056980736
    %v858 = vmul.bf16 %v602, 1056980736
    %v859 = vmul.bf16 %v603, 1056980736
    %v860 = vmul.bf16 %v604, 1056980736
    %v861 = vmul.bf16 %v605, 1056980736
    %v862 = vmul.bf16 %v606, 1056980736
    %v863 = vmul.bf16 %v607, 1056980736
    %v864 = vmul.bf16 %v608, 1056980736
    %v865 = vmul.bf16 %v609, 1056980736
    %v866 = vmul.bf16 %v610, 1056980736
    %v867 = vmul.bf16 %v611, 1056980736
    %v868 = vmul.bf16 %v612, 1056980736
    %v869 = vmul.bf16 %v613, 1056980736
    %v870 = vmul.bf16 %v614, 1056980736
    %v871 = vmul.bf16 %v615, 1056980736
    %v872 = vmul.bf16 %v616, 1056980736
    %v873 = vmul.bf16 %v617, 1056980736
    %v874 = vmul.bf16 %v618, 1056980736
    %v875 = vmul.bf16 %v619, 1056980736
    %v876 = vmul.bf16 %v620, 1056980736
    %v877 = vmul.bf16 %v621, 1056980736
    %v878 = vmul.bf16 %v622, 1056980736
    %v879 = vmul.bf16 %v623, 1056980736
    %v880 = vmul.bf16 %v624, 1056980736
    %v881 = vmul.bf16 %v625, 1056980736
    %v882 = vmul.bf16 %v626, 1056980736
    %v883 = vmul.bf16 %v627, 1056980736
    %v884 = vmul.bf16 %v628, 1056980736
    %v885 = vmul.bf16 %v629, 1056980736
    %v886 = vmul.bf16 %v630, 1056980736
    %v887 = vmul.bf16 %v631, 1056980736
    %v888 = vmul.bf16 %v632, 1056980736
    %v889 = vmul.bf16 %v633, 1056980736
    %v890 = vmul.bf16 %v634, 1056980736
    %v891 = vmul.bf16 %v635, 1056980736
    %v892 = vmul.bf16 %v636, 1056980736
    %v893 = vmul.bf16 %v637, 1056980736
    %v894 = vmul.bf16 %v638, 1056980736
    %v895 = vmul.bf16 %v639, 1056980736
    %v896 = vmul.bf16 %v640, 1056980736
    %v897 = vmul.bf16 %v641, 1056980736
    %v898 = vmul.bf16 %v642, 1056980736
    %v899 = vmul.bf16 %v643, 1056980736
    %v900 = vmul.bf16 %v644, 1056980736
    %v901 = vmul.bf16 %v645, 1056980736
    %v902 = vmul.bf16 %v646, 1056980736
    %v903 = vmul.bf16 %v647, 1056980736
    %v904 = vmul.bf16 %v648, 1056980736
    %v905 = vmul.bf16 %v649, 1056980736
    %v906 = vmul.bf16 %v650, 1056980736
    %v907 = vmul.bf16 %v651, 1056980736
    %v908 = vmul.bf16 %v652, 1056980736
    %v909 = vmul.bf16 %v653, 1056980736
    %v910 = vmul.bf16 %v654, 1056980736
    %v911 = vmul.bf16 %v655, 1056980736
    %v912 = vmul.bf16 %v656, 1056980736
    %v913 = vmul.bf16 %v657, 1056980736
    %v914 = vmul.bf16 %v658, 1056980736
    %v915 = vmul.bf16 %v659, 1056980736
    %v916 = vmul.bf16 %v660, 1056980736
    %v917 = vmul.bf16 %v661, 1056980736
    %v918 = vmul.bf16 %v662, 1056980736
    %v919 = vmul.bf16 %v663, 1056980736
    %v920 = vmul.bf16 %v664, 1056980736
    %v921 = vmul.bf16 %v665, 1056980736
    %v922 = vmul.bf16 %v666, 1056980736
    %v923 = vmul.bf16 %v667, 1056980736
    %v924 = vmul.bf16 %v668, 1056980736
    %v925 = vmul.bf16 %v669, 1056980736
    %v926 = vmul.bf16 %v670, 1056980736
    %v927 = vmul.bf16 %v671, 1056980736
    %v928 = vmul.bf16 %v672, 1056980736
    %v929 = vmul.bf16 %v673, 1056980736
    %v930 = vmul.bf16 %v674, 1056980736
    %v931 = vmul.bf16 %v675, 1056980736
    %v932 = vmul.bf16 %v676, 1056980736
    %v933 = vmul.bf16 %v677, 1056980736
    %v934 = vmul.bf16 %v678, 1056980736
    %v935 = vmul.bf16 %v679, 1056980736
    %v936 = vmul.bf16 %v680, 1056980736
    %v937 = vmul.bf16 %v681, 1056980736
    %v938 = vmul.bf16 %v682, 1056980736
    %v939 = vmul.bf16 %v683, 1056980736
    %v940 = vmul.bf16 %v684, 1056980736
    %v941 = vmul.bf16 %v685, 1056980736
    %v942 = vmul.bf16 %v686, 1056980736
    %v943 = vmul.bf16 %v687, 1056980736
    %v944 = vmul.bf16 %v688, 1056980736
    %v945 = vmul.bf16 %v689, 1056980736
    %v946 = vmul.bf16 %v690, 1056980736
    %v947 = vmul.bf16 %v691, 1056980736
    %v948 = vmul.bf16 %v692, 1056980736
    %v949 = vmul.bf16 %v693, 1056980736
    %v950 = vmul.bf16 %v694, 1056980736
    %v951 = vmul.bf16 %v695, 1056980736
    %v952 = vmul.bf16 %v696, 1056980736
    %v953 = vmul.bf16 %v697, 1056980736
    %v954 = vmul.bf16 %v698, 1056980736
    %v955 = vmul.bf16 %v699, 1056980736
    %v956 = vmul.bf16 %v700, 1056980736
    %v957 = vmul.bf16 %v701, 1056980736
    %v958 = vmul.bf16 %v702, 1056980736
    %v959 = vmul.bf16 %v703, 1056980736
    %v960 = vmul.bf16 %v704, 1056980736
    %v961 = vmul.bf16 %v705, 1056980736
    %v962 = vmul.bf16 %v706, 1056980736
    %v963 = vmul.bf16 %v707, 1056980736
    %v964 = vmul.bf16 %v708, 1056980736
    %v965 = vmul.bf16 %v709, 1056980736
    %v966 = vmul.bf16 %v710, 1056980736
    %v967 = vmul.bf16 %v711, 1056980736
    %v968 = vmul.bf16 %v712, 1056980736
    %v969 = vmul.bf16 %v713, 1056980736
    %v970 = vmul.bf16 %v714, 1056980736
    %v971 = vmul.bf16 %v715, 1056980736
    %v972 = vmul.bf16 %v716, 1056980736
    %v973 = vmul.bf16 %v717, 1056980736
    %v974 = vmul.bf16 %v718, 1056980736
    %v975 = vmul.bf16 %v719, 1056980736
    %v976 = vmul.bf16 %v720, 1056980736
    %v977 = vmul.bf16 %v721, 1056980736
    %v978 = vmul.bf16 %v722, 1056980736
    %v979 = vmul.bf16 %v723, 1056980736
    %v980 = vmul.bf16 %v724, 1056980736
    %v981 = vmul.bf16 %v725, 1056980736
    %v982 = vmul.bf16 %v726, 1056980736
    %v983 = vmul.bf16 %v727, 1056980736
    %v984 = vmul.bf16 %v728, 1056980736
    %v985 = vmul.bf16 %v729, 1056980736
    %v986 = vmul.bf16 %v730, 1056980736
    %v987 = vmul.bf16 %v731, 1056980736
    %v988 = vmul.bf16 %v732, 1056980736
    %v989 = vmul.bf16 %v733, 1056980736
    %v990 = vmul.bf16 %v734, 1056980736
    %v991 = vmul.bf16 %v735, 1056980736
    %v992 = vmul.bf16 %v736, 1056980736
    %v993 = vmul.bf16 %v737, 1056980736
    %v994 = vmul.bf16 %v738, 1056980736
    %v995 = vmul.bf16 %v739, 1056980736
    %v996 = vmul.bf16 %v740, 1056980736
    %v997 = vmul.bf16 %v741, 1056980736
    %v998 = vmul.bf16 %v742, 1056980736
    %v999 = vmul.bf16 %v743, 1056980736
    %v1000 = vmul.bf16 %v744, 1056980736
    %v1001 = vmul.bf16 %v745, 1056980736
    %v1002 = vmul.bf16 %v746, 1056980736
    %v1003 = vmul.bf16 %v747, 1056980736
    %v1004 = vmul.bf16 %v748, 1056980736
    %v1005 = vmul.bf16 %v749, 1056980736
    %v1006 = vmul.bf16 %v750, 1056980736
    %v1007 = vmul.bf16 %v751, 1056980736
    %v1008 = vmul.bf16 %v752, 1056980736
    %v1009 = vmul.bf16 %v753, 1056980736
    %v1010 = vmul.bf16 %v754, 1056980736
    %v1011 = vmul.bf16 %v755, 1056980736
    %v1012 = vmul.bf16 %v756, 1056980736
    %v1013 = vmul.bf16 %v757, 1056980736
    %v1014 = vmul.bf16 %v758, 1056980736
    %v1015 = vmul.bf16 %v759, 1056980736
    %v1016 = vmul.bf16 %v760, 1056980736
    %v1017 = vmul.bf16 %v761, 1056980736
    %v1018 = vmul.bf16 %v762, 1056980736
    %v1019 = vmul.bf16 %v763, 1056980736
    %v1020 = vmul.bf16 %v764, 1056980736
    %v1021 = vmul.bf16 %v765, 1056980736
    %v1022 = vmul.bf16 %v766, 1056980736
    %v1023 = vmul.bf16 %v767, 1056980736
    %v1024 = vmul.bf16 %v768, 1056980736
    %v1025 = vmul.bf16 %v769, 1056980736
    %v1026 = vmul.bf16 %v770, 1056980736
    %v1027 = vmul.bf16 %v771, 1056980736
    %v1028 = vmul.bf16 %v772, 1056980736
    %v1029 = vmul.bf16 %v773, 1056980736
    %v1030 = vmul.bf16 %v774, 1056980736
    %v1031 = vmul.bf16 %v775, 1056980736
    %v1032 = vmul.bf16 %v776, 1056980736
    %v1033 = vmul.bf16 %v777, 1056980736
    %v1034 = vmul.bf16 %v778, 1056980736
    %v1035 = vmul.bf16 %v779, 1056980736
    %v1036 = vmul.bf16 %v780, 1056980736
    %v1037 = vmul.bf16 %v781, 1056980736
    %v1038 = vmul.bf16 %v782, 1056980736
    %v1039 = vmul.bf16 %v783, 1056980736
    %v1040 = vmul.bf16 %v784, 1056980736
    %v1041 = vmul.bf16 %v785, 1056980736
    %v1042 = vmul.bf16 %v786, 1056980736
    %v1043 = vmul.bf16 %v787, 1056980736
    %v1044 = vmul.bf16 %v788, 1056980736
    %v1045 = vmul.bf16 %v789, 1056980736
    %v1046 = vmul.bf16 %v790, 1056980736
    %v1047 = vmul.bf16 %v791, 1056980736
    %v1048 = vmul.bf16 %v792, 1056980736
    %v1049 = vmul.bf16 %v793, 1056980736
    %v1050 = vmul.bf16 %v794, 1056980736
    %v1051 = vmul.bf16 %v795, 1056980736
    %v1052 = vmul.bf16 %v796, 1056980736
    %v1053 = vmul.bf16 %v797, 1056980736
    %v1054 = vmul.bf16 %v798, 1056980736
    %v1055 = vmul.bf16 %v799, 1056980736
    %v1056 = vmul.bf16 %v800, 1056980736
    %v1057 = vmul.bf16 %v801, 1056980736
    %v1058 = vmul.bf16 %v802, 1056980736
    %v1059 = vmul.bf16 %v803, 1056980736
    %v1060 = vmul.bf16 %v804, 1056980736
    %v1061 = vmul.bf16 %v805, 1056980736
    %v1062 = vmul.bf16 %v806, 1056980736
    %v1063 = vmul.bf16 %v807, 1056980736
    %v1064 = vmul.bf16 %v808, 1056980736
    %v1065 = vadd.bf16 %v297, %v809
    %v1066 = vadd.bf16 %v298, %v810
    %v1067 = vadd.bf16 %v299, %v811
    %v1068 = vadd.bf16 %v300, %v812
    %v1069 = vadd.bf16 %v301, %v813
    %v1070 = vadd.bf16 %v302, %v814
    %v1071 = vadd.bf16 %v303, %v815
    %v1072 = vadd.bf16 %v304, %v816
    %v1073 = vadd.bf16 %v305, %v817
    %v1074 = vadd.bf16 %v306, %v818
    %v1075 = vadd.bf16 %v307, %v819
    %v1076 = vadd.bf16 %v308, %v820
    %v1077 = vadd.bf16 %v309, %v821
    %v1078 = vadd.bf16 %v310, %v822
    %v1079 = vadd.bf16 %v311, %v823
    %v1080 = vadd.bf16 %v312, %v824
    %v1081 = vadd.bf16 %v313, %v825
    %v1082 = vadd.bf16 %v314, %v826
    %v1083 = vadd.bf16 %v315, %v827
    %v1084 = vadd.bf16 %v316, %v828
    %v1085 = vadd.bf16 %v317, %v829
    %v1086 = vadd.bf16 %v318, %v830
    %v1087 = vadd.bf16 %v319, %v831
    %v1088 = vadd.bf16 %v320, %v832
    %v1089 = vadd.bf16 %v321, %v833
    %v1090 = vadd.bf16 %v322, %v834
    %v1091 = vadd.bf16 %v323, %v835
    %v1092 = vadd.bf16 %v324, %v836
    %v1093 = vadd.bf16 %v325, %v837
    %v1094 = vadd.bf16 %v326, %v838
    %v1095 = vadd.bf16 %v327, %v839
    %v1096 = vadd.bf16 %v328, %v840
    %v1097 = vadd.bf16 %v329, %v841
    %v1098 = vadd.bf16 %v330, %v842
    %v1099 = vadd.bf16 %v331, %v843
    %v1100 = vadd.bf16 %v332, %v844
    %v1101 = vadd.bf16 %v333, %v845
    %v1102 = vadd.bf16 %v334, %v846
    %v1103 = vadd.bf16 %v335, %v847
    %v1104 = vadd.bf16 %v336, %v848
    %v1105 = vadd.bf16 %v337, %v849
    %v1106 = vadd.bf16 %v338, %v850
    %v1107 = vadd.bf16 %v339, %v851
    %v1108 = vadd.bf16 %v340, %v852
    %v1109 = vadd.bf16 %v341, %v853
    %v1110 = vadd.bf16 %v342, %v854
    %v1111 = vadd.bf16 %v343, %v855
    %v1112 = vadd.bf16 %v344, %v856
    %v1113 = vadd.bf16 %v345, %v857
    %v1114 = vadd.bf16 %v346, %v858
    %v1115 = vadd.bf16 %v347, %v859
    %v1116 = vadd.bf16 %v348, %v860
    %v1117 = vadd.bf16 %v349, %v861
    %v1118 = vadd.bf16 %v350, %v862
    %v1119 = vadd.bf16 %v351, %v863
    %v1120 = vadd.bf16 %v352, %v864
    %v1121 = vadd.bf16 %v353, %v865
    %v1122 = vadd.bf16 %v354, %v866
    %v1123 = vadd.bf16 %v355, %v867
    %v1124 = vadd.bf16 %v356, %v868
    %v1125 = vadd.bf16 %v357, %v869
    %v1126 = vadd.bf16 %v358, %v870
    %v1127 = vadd.bf16 %v359, %v871
    %v1128 = vadd.bf16 %v360, %v872
    %v1129 = vadd.bf16 %v361, %v873
    %v1130 = vadd.bf16 %v362, %v874
    %v1131 = vadd.bf16 %v363, %v875
    %v1132 = vadd.bf16 %v364, %v876
    %v1133 = vadd.bf16 %v365, %v877
    %v1134 = vadd.bf16 %v366, %v878
    %v1135 = vadd.bf16 %v367, %v879
    %v1136 = vadd.bf16 %v368, %v880
    %v1137 = vadd.bf16 %v369, %v881
    %v1138 = vadd.bf16 %v370, %v882
    %v1139 = vadd.bf16 %v371, %v883
    %v1140 = vadd.bf16 %v372, %v884
    %v1141 = vadd.bf16 %v373, %v885
    %v1142 = vadd.bf16 %v374, %v886
    %v1143 = vadd.bf16 %v375, %v887
    %v1144 = vadd.bf16 %v376, %v888
    %v1145 = vadd.bf16 %v377, %v889
    %v1146 = vadd.bf16 %v378, %v890
    %v1147 = vadd.bf16 %v379, %v891
    %v1148 = vadd.bf16 %v380, %v892
    %v1149 = vadd.bf16 %v381, %v893
    %v1150 = vadd.bf16 %v382, %v894
    %v1151 = vadd.bf16 %v383, %v895
    %v1152 = vadd.bf16 %v384, %v896
    %v1153 = vadd.bf16 %v385, %v897
    %v1154 = vadd.bf16 %v386, %v898
    %v1155 = vadd.bf16 %v387, %v899
    %v1156 = vadd.bf16 %v388, %v900
    %v1157 = vadd.bf16 %v389, %v901
    %v1158 = vadd.bf16 %v390, %v902
    %v1159 = vadd.bf16 %v391, %v903
    %v1160 = vadd.bf16 %v392, %v904
    %v1161 = vadd.bf16 %v393, %v905
    %v1162 = vadd.bf16 %v394, %v906
    %v1163 = vadd.bf16 %v395, %v907
    %v1164 = vadd.bf16 %v396, %v908
    %v1165 = vadd.bf16 %v397, %v909
    %v1166 = vadd.bf16 %v398, %v910
    %v1167 = vadd.bf16 %v399, %v911
    %v1168 = vadd.bf16 %v400, %v912
    %v1169 = vadd.bf16 %v401, %v913
    %v1170 = vadd.bf16 %v402, %v914
    %v1171 = vadd.bf16 %v403, %v915
    %v1172 = vadd.bf16 %v404, %v916
    %v1173 = vadd.bf16 %v405, %v917
    %v1174 = vadd.bf16 %v406, %v918
    %v1175 = vadd.bf16 %v407, %v919
    %v1176 = vadd.bf16 %v408, %v920
    %v1177 = vadd.bf16 %v409, %v921
    %v1178 = vadd.bf16 %v410, %v922
    %v1179 = vadd.bf16 %v411, %v923
    %v1180 = vadd.bf16 %v412, %v924
    %v1181 = vadd.bf16 %v413, %v925
    %v1182 = vadd.bf16 %v414, %v926
    %v1183 = vadd.bf16 %v415, %v927
    %v1184 = vadd.bf16 %v416, %v928
    %v1185 = vadd.bf16 %v417, %v929
    %v1186 = vadd.bf16 %v418, %v930
    %v1187 = vadd.bf16 %v419, %v931
    %v1188 = vadd.bf16 %v420, %v932
    %v1189 = vadd.bf16 %v421, %v933
    %v1190 = vadd.bf16 %v422, %v934
    %v1191 = vadd.bf16 %v423, %v935
    %v1192 = vadd.bf16 %v424, %v936
    %v1193 = vadd.bf16 %v425, %v937
    %v1194 = vadd.bf16 %v426, %v938
    %v1195 = vadd.bf16 %v427, %v939
    %v1196 = vadd.bf16 %v428, %v940
    %v1197 = vadd.bf16 %v429, %v941
    %v1198 = vadd.bf16 %v430, %v942
    %v1199 = vadd.bf16 %v431, %v943
    %v1200 = vadd.bf16 %v432, %v944
    %v1201 = vadd.bf16 %v433, %v945
    %v1202 = vadd.bf16 %v434, %v946
    %v1203 = vadd.bf16 %v435, %v947
    %v1204 = vadd.bf16 %v436, %v948
    %v1205 = vadd.bf16 %v437, %v949
    %v1206 = vadd.bf16 %v438, %v950
    %v1207 = vadd.bf16 %v439, %v951
    %v1208 = vadd.bf16 %v440, %v952
    %v1209 = vadd.bf16 %v441, %v953
    %v1210 = vadd.bf16 %v442, %v954
    %v1211 = vadd.bf16 %v443, %v955
    %v1212 = vadd.bf16 %v444, %v956
    %v1213 = vadd.bf16 %v445, %v957
    %v1214 = vadd.bf16 %v446, %v958
    %v1215 = vadd.bf16 %v447, %v959
    %v1216 = vadd.bf16 %v448, %v960
    %v1217 = vadd.bf16 %v449, %v961
    %v1218 = vadd.bf16 %v450, %v962
    %v1219 = vadd.bf16 %v451, %v963
    %v1220 = vadd.bf16 %v452, %v964
    %v1221 = vadd.bf16 %v453, %v965
    %v1222 = vadd.bf16 %v454, %v966
    %v1223 = vadd.bf16 %v455, %v967
    %v1224 = vadd.bf16 %v456, %v968
    %v1225 = vadd.bf16 %v457, %v969
    %v1226 = vadd.bf16 %v458, %v970
    %v1227 = vadd.bf16 %v459, %v971
    %v1228 = vadd.bf16 %v460, %v972
    %v1229 = vadd.bf16 %v461, %v973
    %v1230 = vadd.bf16 %v462, %v974
    %v1231 = vadd.bf16 %v463, %v975
    %v1232 = vadd.bf16 %v464, %v976
    %v1233 = vadd.bf16 %v465, %v977
    %v1234 = vadd.bf16 %v466, %v978
    %v1235 = vadd.bf16 %v467, %v979
    %v1236 = vadd.bf16 %v468, %v980
    %v1237 = vadd.bf16 %v469, %v981
    %v1238 = vadd.bf16 %v470, %v982
    %v1239 = vadd.bf16 %v471, %v983
    %v1240 = vadd.bf16 %v472, %v984
    %v1241 = vadd.bf16 %v473, %v985
    %v1242 = vadd.bf16 %v474, %v986
    %v1243 = vadd.bf16 %v475, %v987
    %v1244 = vadd.bf16 %v476, %v988
    %v1245 = vadd.bf16 %v477, %v989
    %v1246 = vadd.bf16 %v478, %v990
    %v1247 = vadd.bf16 %v479, %v991
    %v1248 = vadd.bf16 %v480, %v992
    %v1249 = vadd.bf16 %v481, %v993
    %v1250 = vadd.bf16 %v482, %v994
    %v1251 = vadd.bf16 %v483, %v995
    %v1252 = vadd.bf16 %v484, %v996
    %v1253 = vadd.bf16 %v485, %v997
    %v1254 = vadd.bf16 %v486, %v998
    %v1255 = vadd.bf16 %v487, %v999
    %v1256 = vadd.bf16 %v488, %v1000
    %v1257 = vadd.bf16 %v489, %v1001
    %v1258 = vadd.bf16 %v490, %v1002
    %v1259 = vadd.bf16 %v491, %v1003
    %v1260 = vadd.bf16 %v492, %v1004
    %v1261 = vadd.bf16 %v493, %v1005
    %v1262 = vadd.bf16 %v494, %v1006
    %v1263 = vadd.bf16 %v495, %v1007
    %v1264 = vadd.bf16 %v496, %v1008
    %v1265 = vadd.bf16 %v497, %v1009
    %v1266 = vadd.bf16 %v498, %v1010
    %v1267 = vadd.bf16 %v499, %v1011
    %v1268 = vadd.bf16 %v500, %v1012
    %v1269 = vadd.bf16 %v501, %v1013
    %v1270 = vadd.bf16 %v502, %v1014
    %v1271 = vadd.bf16 %v503, %v1015
    %v1272 = vadd.bf16 %v504, %v1016
    %v1273 = vadd.bf16 %v505, %v1017
    %v1274 = vadd.bf16 %v506, %v1018
    %v1275 = vadd.bf16 %v507, %v1019
    %v1276 = vadd.bf16 %v508, %v1020
    %v1277 = vadd.bf16 %v509, %v1021
    %v1278 = vadd.bf16 %v510, %v1022
    %v1279 = vadd.bf16 %v511, %v1023
    %v1280 = vadd.bf16 %v512, %v1024
    %v1281 = vadd.bf16 %v513, %v1025
    %v1282 = vadd.bf16 %v514, %v1026
    %v1283 = vadd.bf16 %v515, %v1027
    %v1284 = vadd.bf16 %v516, %v1028
    %v1285 = vadd.bf16 %v517, %v1029
    %v1286 = vadd.bf16 %v518, %v1030
    %v1287 = vadd.bf16 %v519, %v1031
    %v1288 = vadd.bf16 %v520, %v1032
    %v1289 = vadd.bf16 %v521, %v1033
    %v1290 = vadd.bf16 %v522, %v1034
    %v1291 = vadd.bf16 %v523, %v1035
    %v1292 = vadd.bf16 %v524, %v1036
    %v1293 = vadd.bf16 %v525, %v1037
    %v1294 = vadd.bf16 %v526, %v1038
    %v1295 = vadd.bf16 %v527, %v1039
    %v1296 = vadd.bf16 %v528, %v1040
    %v1297 = vadd.bf16 %v529, %v1041
    %v1298 = vadd.bf16 %v530, %v1042
    %v1299 = vadd.bf16 %v531, %v1043
    %v1300 = vadd.bf16 %v532, %v1044
    %v1301 = vadd.bf16 %v533, %v1045
    %v1302 = vadd.bf16 %v534, %v1046
    %v1303 = vadd.bf16 %v535, %v1047
    %v1304 = vadd.bf16 %v536, %v1048
    %v1305 = vadd.bf16 %v537, %v1049
    %v1306 = vadd.bf16 %v538, %v1050
    %v1307 = vadd.bf16 %v539, %v1051
    %v1308 = vadd.bf16 %v540, %v1052
    %v1309 = vadd.bf16 %v541, %v1053
    %v1310 = vadd.bf16 %v542, %v1054
    %v1311 = vadd.bf16 %v543, %v1055
    %v1312 = vadd.bf16 %v544, %v1056
    %v1313 = vadd.bf16 %v545, %v1057
    %v1314 = vadd.bf16 %v546, %v1058
    %v1315 = vadd.bf16 %v547, %v1059
    %v1316 = vadd.bf16 %v548, %v1060
    %v1317 = vadd.bf16 %v549, %v1061
    %v1318 = vadd.bf16 %v550, %v1062
    %v1319 = vadd.bf16 %v551, %v1063
    %v1320 = vadd.bf16 %v552, %v1064
    %1321 = vst [vmem:[#allocation7] sm:$0xff] %v1065
    %1322 = vst [vmem:[#allocation7 + $0x8] sm:$0xff] %v1066
    %1323 = vst [vmem:[#allocation7 + $0x10] sm:$0xff] %v1067
    %1324 = vst [vmem:[#allocation7 + $0x18] sm:$0xff] %v1068
    %1325 = vst [vmem:[#allocation7 + $0x20] sm:$0xff] %v1069
    %1326 = vst [vmem:[#allocation7 + $0x28] sm:$0xff] %v1070
    %1327 = vst [vmem:[#allocation7 + $0x30] sm:$0xff] %v1071
    %1328 = vst [vmem:[#allocation7 + $0x38] sm:$0xff] %v1072
    %1329 = vst [vmem:[#allocation7 + $0x40] sm:$0xff] %v1073
    %1330 = vst [vmem:[#allocation7 + $0x48] sm:$0xff] %v1074
    %1331 = vst [vmem:[#allocation7 + $0x50] sm:$0xff] %v1075
    %1332 = vst [vmem:[#allocation7 + $0x58] sm:$0xff] %v1076
    %1333 = vst [vmem:[#allocation7 + $0x60] sm:$0xff] %v1077
    %1334 = vst [vmem:[#allocation7 + $0x68] sm:$0xff] %v1078
    %1335 = vst [vmem:[#allocation7 + $0x70] sm:$0xff] %v1079
    %1336 = vst [vmem:[#allocation7 + $0x78] sm:$0xff] %v1080
    %1337 = vst [vmem:[#allocation7 + $0x80] sm:$0xff] %v1081
    %1338 = vst [vmem:[#allocation7 + $0x88] sm:$0xff] %v1082
    %1339 = vst [vmem:[#allocation7 + $0x90] sm:$0xff] %v1083
    %1340 = vst [vmem:[#allocation7 + $0x98] sm:$0xff] %v1084
    %1341 = vst [vmem:[#allocation7 + $0xa0] sm:$0xff] %v1085
    %1342 = vst [vmem:[#allocation7 + $0xa8] sm:$0xff] %v1086
    %1343 = vst [vmem:[#allocation7 + $0xb0] sm:$0xff] %v1087
    %1344 = vst [vmem:[#allocation7 + $0xb8] sm:$0xff] %v1088
    %1345 = vst [vmem:[#allocation7 + $0xc0] sm:$0xff] %v1089
    %1346 = vst [vmem:[#allocation7 + $0xc8] sm:$0xff] %v1090
    %1347 = vst [vmem:[#allocation7 + $0xd0] sm:$0xff] %v1091
    %1348 = vst [vmem:[#allocation7 + $0xd8] sm:$0xff] %v1092
    %1349 = vst [vmem:[#allocation7 + $0xe0] sm:$0xff] %v1093
    %1350 = vst [vmem:[#allocation7 + $0xe8] sm:$0xff] %v1094
    %1351 = vst [vmem:[#allocation7 + $0xf0] sm:$0xff] %v1095
    %1352 = vst [vmem:[#allocation7 + $0xf8] sm:$0xff] %v1096
    %1353 = vst [vmem:[#allocation7 + $0x100] sm:$0xff] %v1097
    %1354 = vst [vmem:[#allocation7 + $0x108] sm:$0xff] %v1098
    %1355 = vst [vmem:[#allocation7 + $0x110] sm:$0xff] %v1099
    %1356 = vst [vmem:[#allocation7 + $0x118] sm:$0xff] %v1100
    %1357 = vst [vmem:[#allocation7 + $0x120] sm:$0xff] %v1101
    %1358 = vst [vmem:[#allocation7 + $0x128] sm:$0xff] %v1102
    %1359 = vst [vmem:[#allocation7 + $0x130] sm:$0xff] %v1103
    %1360 = vst [vmem:[#allocation7 + $0x138] sm:$0xff] %v1104
    %1361 = vst [vmem:[#allocation7 + $0x140] sm:$0xff] %v1105
    %1362 = vst [vmem:[#allocation7 + $0x148] sm:$0xff] %v1106
    %1363 = vst [vmem:[#allocation7 + $0x150] sm:$0xff] %v1107
    %1364 = vst [vmem:[#allocation7 + $0x158] sm:$0xff] %v1108
    %1365 = vst [vmem:[#allocation7 + $0x160] sm:$0xff] %v1109
    %1366 = vst [vmem:[#allocation7 + $0x168] sm:$0xff] %v1110
    %1367 = vst [vmem:[#allocation7 + $0x170] sm:$0xff] %v1111
    %1368 = vst [vmem:[#allocation7 + $0x178] sm:$0xff] %v1112
    %1369 = vst [vmem:[#allocation7 + $0x180] sm:$0xff] %v1113
    %1370 = vst [vmem:[#allocation7 + $0x188] sm:$0xff] %v1114
    %1371 = vst [vmem:[#allocation7 + $0x190] sm:$0xff] %v1115
    %1372 = vst [vmem:[#allocation7 + $0x198] sm:$0xff] %v1116
    %1373 = vst [vmem:[#allocation7 + $0x1a0] sm:$0xff] %v1117
    %1374 = vst [vmem:[#allocation7 + $0x1a8] sm:$0xff] %v1118
    %1375 = vst [vmem:[#allocation7 + $0x1b0] sm:$0xff] %v1119
    %1376 = vst [vmem:[#allocation7 + $0x1b8] sm:$0xff] %v1120
    %1377 = vst [vmem:[#allocation7 + $0x1c0] sm:$0xff] %v1121
    %1378 = vst [vmem:[#allocation7 + $0x1c8] sm:$0xff] %v1122
    %1379 = vst [vmem:[#allocation7 + $0x1d0] sm:$0xff] %v1123
    %1380 = vst [vmem:[#allocation7 + $0x1d8] sm:$0xff] %v1124
    %1381 = vst [vmem:[#allocation7 + $0x1e0] sm:$0xff] %v1125
    %1382 = vst [vmem:[#allocation7 + $0x1e8] sm:$0xff] %v1126
    %1383 = vst [vmem:[#allocation7 + $0x1f0] sm:$0xff] %v1127
    %1384 = vst [vmem:[#allocation7 + $0x1f8] sm:$0xff] %v1128
    %1385 = vst [vmem:[#allocation7 + $0x200] sm:$0xff] %v1129
    %1386 = vst [vmem:[#allocation7 + $0x208] sm:$0xff] %v1130
    %1387 = vst [vmem:[#allocation7 + $0x210] sm:$0xff] %v1131
    %1388 = vst [vmem:[#allocation7 + $0x218] sm:$0xff] %v1132
    %1389 = vst [vmem:[#allocation7 + $0x220] sm:$0xff] %v1133
    %1390 = vst [vmem:[#allocation7 + $0x228] sm:$0xff] %v1134
    %1391 = vst [vmem:[#allocation7 + $0x230] sm:$0xff] %v1135
    %1392 = vst [vmem:[#allocation7 + $0x238] sm:$0xff] %v1136
    %1393 = vst [vmem:[#allocation7 + $0x240] sm:$0xff] %v1137
    %1394 = vst [vmem:[#allocation7 + $0x248] sm:$0xff] %v1138
    %1395 = vst [vmem:[#allocation7 + $0x250] sm:$0xff] %v1139
    %1396 = vst [vmem:[#allocation7 + $0x258] sm:$0xff] %v1140
    %1397 = vst [vmem:[#allocation7 + $0x260] sm:$0xff] %v1141
    %1398 = vst [vmem:[#allocation7 + $0x268] sm:$0xff] %v1142
    %1399 = vst [vmem:[#allocation7 + $0x270] sm:$0xff] %v1143
    %1400 = vst [vmem:[#allocation7 + $0x278] sm:$0xff] %v1144
    %1401 = vst [vmem:[#allocation7 + $0x280] sm:$0xff] %v1145
    %1402 = vst [vmem:[#allocation7 + $0x288] sm:$0xff] %v1146
    %1403 = vst [vmem:[#allocation7 + $0x290] sm:$0xff] %v1147
    %1404 = vst [vmem:[#allocation7 + $0x298] sm:$0xff] %v1148
    %1405 = vst [vmem:[#allocation7 + $0x2a0] sm:$0xff] %v1149
    %1406 = vst [vmem:[#allocation7 + $0x2a8] sm:$0xff] %v1150
    %1407 = vst [vmem:[#allocation7 + $0x2b0] sm:$0xff] %v1151
    %1408 = vst [vmem:[#allocation7 + $0x2b8] sm:$0xff] %v1152
    %1409 = vst [vmem:[#allocation7 + $0x2c0] sm:$0xff] %v1153
    %1410 = vst [vmem:[#allocation7 + $0x2c8] sm:$0xff] %v1154
    %1411 = vst [vmem:[#allocation7 + $0x2d0] sm:$0xff] %v1155
    %1412 = vst [vmem:[#allocation7 + $0x2d8] sm:$0xff] %v1156
    %1413 = vst [vmem:[#allocation7 + $0x2e0] sm:$0xff] %v1157
    %1414 = vst [vmem:[#allocation7 + $0x2e8] sm:$0xff] %v1158
    %1415 = vst [vmem:[#allocation7 + $0x2f0] sm:$0xff] %v1159
    %1416 = vst [vmem:[#allocation7 + $0x2f8] sm:$0xff] %v1160
    %1417 = vst [vmem:[#allocation7 + $0x300] sm:$0xff] %v1161
    %1418 = vst [vmem:[#allocation7 + $0x308] sm:$0xff] %v1162
    %1419 = vst [vmem:[#allocation7 + $0x310] sm:$0xff] %v1163
    %1420 = vst [vmem:[#allocation7 + $0x318] sm:$0xff] %v1164
    %1421 = vst [vmem:[#allocation7 + $0x320] sm:$0xff] %v1165
    %1422 = vst [vmem:[#allocation7 + $0x328] sm:$0xff] %v1166
    %1423 = vst [vmem:[#allocation7 + $0x330] sm:$0xff] %v1167
    %1424 = vst [vmem:[#allocation7 + $0x338] sm:$0xff] %v1168
    %1425 = vst [vmem:[#allocation7 + $0x340] sm:$0xff] %v1169
    %1426 = vst [vmem:[#allocation7 + $0x348] sm:$0xff] %v1170
    %1427 = vst [vmem:[#allocation7 + $0x350] sm:$0xff] %v1171
    %1428 = vst [vmem:[#allocation7 + $0x358] sm:$0xff] %v1172
    %1429 = vst [vmem:[#allocation7 + $0x360] sm:$0xff] %v1173
    %1430 = vst [vmem:[#allocation7 + $0x368] sm:$0xff] %v1174
    %1431 = vst [vmem:[#allocation7 + $0x370] sm:$0xff] %v1175
    %1432 = vst [vmem:[#allocation7 + $0x378] sm:$0xff] %v1176
    %1433 = vst [vmem:[#allocation7 + $0x380] sm:$0xff] %v1177
    %1434 = vst [vmem:[#allocation7 + $0x388] sm:$0xff] %v1178
    %1435 = vst [vmem:[#allocation7 + $0x390] sm:$0xff] %v1179
    %1436 = vst [vmem:[#allocation7 + $0x398] sm:$0xff] %v1180
    %1437 = vst [vmem:[#allocation7 + $0x3a0] sm:$0xff] %v1181
    %1438 = vst [vmem:[#allocation7 + $0x3a8] sm:$0xff] %v1182
    %1439 = vst [vmem:[#allocation7 + $0x3b0] sm:$0xff] %v1183
    %1440 = vst [vmem:[#allocation7 + $0x3b8] sm:$0xff] %v1184
    %1441 = vst [vmem:[#allocation7 + $0x3c0] sm:$0xff] %v1185
    %1442 = vst [vmem:[#allocation7 + $0x3c8] sm:$0xff] %v1186
    %1443 = vst [vmem:[#allocation7 + $0x3d0] sm:$0xff] %v1187
    %1444 = vst [vmem:[#allocation7 + $0x3d8] sm:$0xff] %v1188
    %1445 = vst [vmem:[#allocation7 + $0x3e0] sm:$0xff] %v1189
    %1446 = vst [vmem:[#allocation7 + $0x3e8] sm:$0xff] %v1190
    %1447 = vst [vmem:[#allocation7 + $0x3f0] sm:$0xff] %v1191
    %1448 = vst [vmem:[#allocation7 + $0x3f8] sm:$0xff] %v1192
    %1449 = vst [vmem:[#allocation7 + $0x400] sm:$0xff] %v1193
    %1450 = vst [vmem:[#allocation7 + $0x408] sm:$0xff] %v1194
    %1451 = vst [vmem:[#allocation7 + $0x410] sm:$0xff] %v1195
    %1452 = vst [vmem:[#allocation7 + $0x418] sm:$0xff] %v1196
    %1453 = vst [vmem:[#allocation7 + $0x420] sm:$0xff] %v1197
    %1454 = vst [vmem:[#allocation7 + $0x428] sm:$0xff] %v1198
    %1455 = vst [vmem:[#allocation7 + $0x430] sm:$0xff] %v1199
    %1456 = vst [vmem:[#allocation7 + $0x438] sm:$0xff] %v1200
    %1457 = vst [vmem:[#allocation7 + $0x440] sm:$0xff] %v1201
    %1458 = vst [vmem:[#allocation7 + $0x448] sm:$0xff] %v1202
    %1459 = vst [vmem:[#allocation7 + $0x450] sm:$0xff] %v1203
    %1460 = vst [vmem:[#allocation7 + $0x458] sm:$0xff] %v1204
    %1461 = vst [vmem:[#allocation7 + $0x460] sm:$0xff] %v1205
    %1462 = vst [vmem:[#allocation7 + $0x468] sm:$0xff] %v1206
    %1463 = vst [vmem:[#allocation7 + $0x470] sm:$0xff] %v1207
    %1464 = vst [vmem:[#allocation7 + $0x478] sm:$0xff] %v1208
    %1465 = vst [vmem:[#allocation7 + $0x480] sm:$0xff] %v1209
    %1466 = vst [vmem:[#allocation7 + $0x488] sm:$0xff] %v1210
    %1467 = vst [vmem:[#allocation7 + $0x490] sm:$0xff] %v1211
    %1468 = vst [vmem:[#allocation7 + $0x498] sm:$0xff] %v1212
    %1469 = vst [vmem:[#allocation7 + $0x4a0] sm:$0xff] %v1213
    %1470 = vst [vmem:[#allocation7 + $0x4a8] sm:$0xff] %v1214
    %1471 = vst [vmem:[#allocation7 + $0x4b0] sm:$0xff] %v1215
    %1472 = vst [vmem:[#allocation7 + $0x4b8] sm:$0xff] %v1216
    %1473 = vst [vmem:[#allocation7 + $0x4c0] sm:$0xff] %v1217
    %1474 = vst [vmem:[#allocation7 + $0x4c8] sm:$0xff] %v1218
    %1475 = vst [vmem:[#allocation7 + $0x4d0] sm:$0xff] %v1219
    %1476 = vst [vmem:[#allocation7 + $0x4d8] sm:$0xff] %v1220
    %1477 = vst [vmem:[#allocation7 + $0x4e0] sm:$0xff] %v1221
    %1478 = vst [vmem:[#allocation7 + $0x4e8] sm:$0xff] %v1222
    %1479 = vst [vmem:[#allocation7 + $0x4f0] sm:$0xff] %v1223
    %1480 = vst [vmem:[#allocation7 + $0x4f8] sm:$0xff] %v1224
    %1481 = vst [vmem:[#allocation7 + $0x500] sm:$0xff] %v1225
    %1482 = vst [vmem:[#allocation7 + $0x508] sm:$0xff] %v1226
    %1483 = vst [vmem:[#allocation7 + $0x510] sm:$0xff] %v1227
    %1484 = vst [vmem:[#allocation7 + $0x518] sm:$0xff] %v1228
    %1485 = vst [vmem:[#allocation7 + $0x520] sm:$0xff] %v1229
    %1486 = vst [vmem:[#allocation7 + $0x528] sm:$0xff] %v1230
    %1487 = vst [vmem:[#allocation7 + $0x530] sm:$0xff] %v1231
    %1488 = vst [vmem:[#allocation7 + $0x538] sm:$0xff] %v1232
    %1489 = vst [vmem:[#allocation7 + $0x540] sm:$0xff] %v1233
    %1490 = vst [vmem:[#allocation7 + $0x548] sm:$0xff] %v1234
    %1491 = vst [vmem:[#allocation7 + $0x550] sm:$0xff] %v1235
    %1492 = vst [vmem:[#allocation7 + $0x558] sm:$0xff] %v1236
    %1493 = vst [vmem:[#allocation7 + $0x560] sm:$0xff] %v1237
    %1494 = vst [vmem:[#allocation7 + $0x568] sm:$0xff] %v1238
    %1495 = vst [vmem:[#allocation7 + $0x570] sm:$0xff] %v1239
    %1496 = vst [vmem:[#allocation7 + $0x578] sm:$0xff] %v1240
    %1497 = vst [vmem:[#allocation7 + $0x580] sm:$0xff] %v1241
    %1498 = vst [vmem:[#allocation7 + $0x588] sm:$0xff] %v1242
    %1499 = vst [vmem:[#allocation7 + $0x590] sm:$0xff] %v1243
    %1500 = vst [vmem:[#allocation7 + $0x598] sm:$0xff] %v1244
    %1501 = vst [vmem:[#allocation7 + $0x5a0] sm:$0xff] %v1245
    %1502 = vst [vmem:[#allocation7 + $0x5a8] sm:$0xff] %v1246
    %1503 = vst [vmem:[#allocation7 + $0x5b0] sm:$0xff] %v1247
    %1504 = vst [vmem:[#allocation7 + $0x5b8] sm:$0xff] %v1248
    %1505 = vst [vmem:[#allocation7 + $0x5c0] sm:$0xff] %v1249
    %1506 = vst [vmem:[#allocation7 + $0x5c8] sm:$0xff] %v1250
    %1507 = vst [vmem:[#allocation7 + $0x5d0] sm:$0xff] %v1251
    %1508 = vst [vmem:[#allocation7 + $0x5d8] sm:$0xff] %v1252
    %1509 = vst [vmem:[#allocation7 + $0x5e0] sm:$0xff] %v1253
    %1510 = vst [vmem:[#allocation7 + $0x5e8] sm:$0xff] %v1254
    %1511 = vst [vmem:[#allocation7 + $0x5f0] sm:$0xff] %v1255
    %1512 = vst [vmem:[#allocation7 + $0x5f8] sm:$0xff] %v1256
    %1513 = vst [vmem:[#allocation7 + $0x600] sm:$0xff] %v1257
    %1514 = vst [vmem:[#allocation7 + $0x608] sm:$0xff] %v1258
    %1515 = vst [vmem:[#allocation7 + $0x610] sm:$0xff] %v1259
    %1516 = vst [vmem:[#allocation7 + $0x618] sm:$0xff] %v1260
    %1517 = vst [vmem:[#allocation7 + $0x620] sm:$0xff] %v1261
    %1518 = vst [vmem:[#allocation7 + $0x628] sm:$0xff] %v1262
    %1519 = vst [vmem:[#allocation7 + $0x630] sm:$0xff] %v1263
    %1520 = vst [vmem:[#allocation7 + $0x638] sm:$0xff] %v1264
    %1521 = vst [vmem:[#allocation7 + $0x640] sm:$0xff] %v1265
    %1522 = vst [vmem:[#allocation7 + $0x648] sm:$0xff] %v1266
    %1523 = vst [vmem:[#allocation7 + $0x650] sm:$0xff] %v1267
    %1524 = vst [vmem:[#allocation7 + $0x658] sm:$0xff] %v1268
    %1525 = vst [vmem:[#allocation7 + $0x660] sm:$0xff] %v1269
    %1526 = vst [vmem:[#allocation7 + $0x668] sm:$0xff] %v1270
    %1527 = vst [vmem:[#allocation7 + $0x670] sm:$0xff] %v1271
    %1528 = vst [vmem:[#allocation7 + $0x678] sm:$0xff] %v1272
    %1529 = vst [vmem:[#allocation7 + $0x680] sm:$0xff] %v1273
    %1530 = vst [vmem:[#allocation7 + $0x688] sm:$0xff] %v1274
    %1531 = vst [vmem:[#allocation7 + $0x690] sm:$0xff] %v1275
    %1532 = vst [vmem:[#allocation7 + $0x698] sm:$0xff] %v1276
    %1533 = vst [vmem:[#allocation7 + $0x6a0] sm:$0xff] %v1277
    %1534 = vst [vmem:[#allocation7 + $0x6a8] sm:$0xff] %v1278
    %1535 = vst [vmem:[#allocation7 + $0x6b0] sm:$0xff] %v1279
    %1536 = vst [vmem:[#allocation7 + $0x6b8] sm:$0xff] %v1280
    %1537 = vst [vmem:[#allocation7 + $0x6c0] sm:$0xff] %v1281
    %1538 = vst [vmem:[#allocation7 + $0x6c8] sm:$0xff] %v1282
    %1539 = vst [vmem:[#allocation7 + $0x6d0] sm:$0xff] %v1283
    %1540 = vst [vmem:[#allocation7 + $0x6d8] sm:$0xff] %v1284
    %1541 = vst [vmem:[#allocation7 + $0x6e0] sm:$0xff] %v1285
    %1542 = vst [vmem:[#allocation7 + $0x6e8] sm:$0xff] %v1286
    %1543 = vst [vmem:[#allocation7 + $0x6f0] sm:$0xff] %v1287
    %1544 = vst [vmem:[#allocation7 + $0x6f8] sm:$0xff] %v1288
    %1545 = vst [vmem:[#allocation7 + $0x700] sm:$0xff] %v1289
    %1546 = vst [vmem:[#allocation7 + $0x708] sm:$0xff] %v1290
    %1547 = vst [vmem:[#allocation7 + $0x710] sm:$0xff] %v1291
    %1548 = vst [vmem:[#allocation7 + $0x718] sm:$0xff] %v1292
    %1549 = vst [vmem:[#allocation7 + $0x720] sm:$0xff] %v1293
    %1550 = vst [vmem:[#allocation7 + $0x728] sm:$0xff] %v1294
    %1551 = vst [vmem:[#allocation7 + $0x730] sm:$0xff] %v1295
    %1552 = vst [vmem:[#allocation7 + $0x738] sm:$0xff] %v1296
    %1553 = vst [vmem:[#allocation7 + $0x740] sm:$0xff] %v1297
    %1554 = vst [vmem:[#allocation7 + $0x748] sm:$0xff] %v1298
    %1555 = vst [vmem:[#allocation7 + $0x750] sm:$0xff] %v1299
    %1556 = vst [vmem:[#allocation7 + $0x758] sm:$0xff] %v1300
    %1557 = vst [vmem:[#allocation7 + $0x760] sm:$0xff] %v1301
    %1558 = vst [vmem:[#allocation7 + $0x768] sm:$0xff] %v1302
    %1559 = vst [vmem:[#allocation7 + $0x770] sm:$0xff] %v1303
    %1560 = vst [vmem:[#allocation7 + $0x778] sm:$0xff] %v1304
    %1561 = vst [vmem:[#allocation7 + $0x780] sm:$0xff] %v1305
    %1562 = vst [vmem:[#allocation7 + $0x788] sm:$0xff] %v1306
    %1563 = vst [vmem:[#allocation7 + $0x790] sm:$0xff] %v1307
    %1564 = vst [vmem:[#allocation7 + $0x798] sm:$0xff] %v1308
    %1565 = vst [vmem:[#allocation7 + $0x7a0] sm:$0xff] %v1309
    %1566 = vst [vmem:[#allocation7 + $0x7a8] sm:$0xff] %v1310
    %1567 = vst [vmem:[#allocation7 + $0x7b0] sm:$0xff] %v1311
    %1568 = vst [vmem:[#allocation7 + $0x7b8] sm:$0xff] %v1312
    %1569 = vst [vmem:[#allocation7 + $0x7c0] sm:$0xff] %v1313
    %1570 = vst [vmem:[#allocation7 + $0x7c8] sm:$0xff] %v1314
    %1571 = vst [vmem:[#allocation7 + $0x7d0] sm:$0xff] %v1315
    %1572 = vst [vmem:[#allocation7 + $0x7d8] sm:$0xff] %v1316
    %1573 = vst [vmem:[#allocation7 + $0x7e0] sm:$0xff] %v1317
    %1574 = vst [vmem:[#allocation7 + $0x7e8] sm:$0xff] %v1318
    %1575 = vst [vmem:[#allocation7 + $0x7f0] sm:$0xff] %v1319
    %1576 = vst [vmem:[#allocation7 + $0x7f8] sm:$0xff] %v1320
    // Predicated region
    $region18: #{tpu_custom_call.1} parent=1 // pred_check
      _
    $region19: #{tpu_custom_call.1} parent=1 // pred_check_branch
      %1578 = sbr.rel (0) target = $region21
    $region20: #{tpu_custom_call.1} parent=1 // pred_region
      %s1580 = ssub.s32 32768, 32768
      %1581 = vsyncadd [#allocation4], %s1580
      %s1582 = sshll.u32 [#allocation7], 4
      %s1583 = int_to_ptr.vmem [resolvable:$true] %s1582
      %1588 = dma.vmem_to_hbm [thread:$0]  %s1583, 32768, %s2, [#allocation4], 512, 512, 32
    $region21: #{tpu_custom_call.1} parent=1 // pred_fallthru
      _
    // Predicated region
    $region22: #{tpu_custom_call.1} parent=1 // pred_check
      _
    $region23: #{tpu_custom_call.1} parent=1 // pred_check_branch
      %1590 = sbr.rel (0) target = $region25
    $region24: #{tpu_custom_call.1} parent=1 // pred_region
      %1591 = dma.done [#allocation4], 32768
    $region25: #{tpu_custom_call.1} parent=1 // pred_fallthru
      _
    %1592 = vsyncpa [#allocation3], 1
    %1593 = vsyncpa [#allocation6], 1
    %1594 = vsyncpa [#allocation4], 1

</llo_original>
